<compile_context>
chip_gen: v7x
topology: tpu7x:2x2x1
jax: 0.10.0
libtpu: 0.0.40
codegen_flags: <defaults>
</compile_context>

<pallas_src>
import math

import jax
import jax.numpy as jnp
import numpy as np
from jax.experimental import pallas as pl
from jax.experimental.pallas import tpu as pltpu

# ---------------------------------------------------------------------------
# problem sizes (small, consistent with the module's forward)
# ---------------------------------------------------------------------------
B = 2          # batch
S = 8          # sequence length
E = 32         # emb_dim
H = 4          # n_heads
D = E // H     # head dim
FF = 64        # ff_dim
LN_EPS = 1e-5

# row indices of the packed (9, E) vector operand
_LN1_G, _LN1_B, _LN2_G, _LN2_B, _BQ, _BK, _BV, _BO, _B2 = range(9)


def _layernorm(x, gamma, beta):
    # x: (R, E); gamma/beta stay 2-D (1, E) so the broadcast is a plain VPU op
    mean = jnp.mean(x, axis=-1, keepdims=True)
    var = jnp.mean(jnp.square(x - mean), axis=-1, keepdims=True)
    return (x - mean) * jax.lax.rsqrt(var + LN_EPS) * gamma + beta


def _gelu_tanh(x):
    # GELU(approximate='tanh')
    c = 0.7978845608028654  # sqrt(2/pi)
    return 0.5 * x * (1.0 + jnp.tanh(c * (x + 0.044715 * x * x * x)))


def _softmax_last(s):
    m = jnp.max(s, axis=-1, keepdims=True)
    p = jnp.exp(s - m)
    denom = jnp.sum(p, axis=-1, keepdims=True)
    # EUP approximate reciprocal: removes the divide from the VPU path.
    return p * pl.reciprocal(denom, approx=True)


# ---------------------------------------------------------------------------
# Pallas kernel: full encoder layer, whole (B, S, E) batch in one invocation
# ---------------------------------------------------------------------------
def encoder_layer_kernel(x_ref, vec_ref, b1_ref, wqkv_ref, wo_ref,
                         w1_ref, w2_ref, out_ref):
    vecs = vec_ref[...]                          # (9, E) packed small vectors
    x = x_ref[...].reshape(B * S, E)             # row-wise view (B*S, E)

    # ---- sub-layer 1: multi-head self-attention on LN1(x) ------------------
    xn = _layernorm(x, vecs[_LN1_G:_LN1_G + 1], vecs[_LN1_B:_LN1_B + 1])

    qkv = jnp.dot(xn, wqkv_ref[...], preferred_element_type=jnp.float32)  # (B*S, 3E)
    # 1/sqrt(d_head) is already folded into the Q columns of wqkv / the bq row.
    q = qkv[:, 0 * E:1 * E] + vecs[_BQ:_BQ + 1]
    k = qkv[:, 1 * E:2 * E] + vecs[_BK:_BK + 1]
    v = qkv[:, 2 * E:3 * E] + vecs[_BV:_BV + 1]

    head_ctx = []
    for h in range(H):                           # static unroll over heads
        lo = h * D
        qh = q[:, lo:lo + D].reshape(B, S, D)
        kh = k[:, lo:lo + D].reshape(B, S, D)
        vh = v[:, lo:lo + D].reshape(B, S, D)
        s = jnp.einsum("bqd,bkd->bqk", qh, kh,
                       preferred_element_type=jnp.float32)      # (B, S, S)
        p = _softmax_last(s)
        ctx = jnp.einsum("bqk,bkd->bqd", p, vh,
                         preferred_element_type=jnp.float32)    # (B, S, D)
        head_ctx.append(ctx.reshape(B * S, D))
    ctx = jnp.concatenate(head_ctx, axis=-1)                    # (B*S, E)

    attn_out = (jnp.dot(ctx, wo_ref[...], preferred_element_type=jnp.float32)
                + vecs[_BO:_BO + 1])
    x1 = x + attn_out                                           # residual 1

    # ---- sub-layer 2: feed-forward on LN2(x1) -------------------------------
    x2n = _layernorm(x1, vecs[_LN2_G:_LN2_G + 1], vecs[_LN2_B:_LN2_B + 1])
    h1 = jnp.dot(x2n, w1_ref[...], preferred_element_type=jnp.float32) + b1_ref[...]
    h1 = _gelu_tanh(h1)
    ff = (jnp.dot(h1, w2_ref[...], preferred_element_type=jnp.float32)
          + vecs[_B2:_B2 + 1])

    out_ref[...] = (x1 + ff).reshape(B, S, E)                   # residual 2
    # TODO(synk): dropout layers are identity here (inference semantics); a
    # training-mode kernel would draw masks via pltpu.prng_seed/prng_random_bits.


# ---------------------------------------------------------------------------
# wrapper: packs parameters, single pallas_call (no grid)
# ---------------------------------------------------------------------------
def encoder_layer(x, params):
    (ln1g, ln1b, wq, bq, wk, bk, wv, bv, wo, bo,
     ln2g, ln2b, w1, b1, w2, b2) = params

    scale = 1.0 / math.sqrt(D)
    # fuse Q/K/V into one (E, 3E) projection; fold the attention scale into Q
    wqkv = jnp.concatenate([wq * scale, wk, wv], axis=1)
    # pack every small (1, E) vector into a single (9, E) operand
    vec_e = jnp.concatenate(
        [ln1g, ln1b, ln2g, ln2b, bq * scale, bk, bv, bo, b2], axis=0)

    vmem = pltpu.MemorySpace.VMEM
    return pl.pallas_call(
        encoder_layer_kernel,
        out_shape=jax.ShapeDtypeStruct((B, S, E), jnp.float32),
        in_specs=[pl.BlockSpec(memory_space=vmem)] * 7,
        out_specs=pl.BlockSpec(memory_space=vmem),
    )(x, vec_e, b1, wqkv, wo, w1, w2)


# ---------------------------------------------------------------------------
# pure-JAX reference (for a correctness check)
# ---------------------------------------------------------------------------
def encoder_layer_ref(x, params):
    (ln1g, ln1b, wq, bq, wk, bk, wv, bv, wo, bo,
     ln2g, ln2b, w1, b1, w2, b2) = params

    def ln(z, g, b):
        m = jnp.mean(z, -1, keepdims=True)
        v = jnp.mean((z - m) ** 2, -1, keepdims=True)
        return (z - m) / jnp.sqrt(v + LN_EPS) * g[0] + b[0]

    xn = ln(x, ln1g, ln1b)
    q = xn @ wq + bq[0]
    k = xn @ wk + bk[0]
    v = xn @ wv + bv[0]
    qh = q.reshape(B, S, H, D).transpose(0, 2, 1, 3)
    kh = k.reshape(B, S, H, D).transpose(0, 2, 1, 3)
    vh = v.reshape(B, S, H, D).transpose(0, 2, 1, 3)
    sc = jnp.einsum("bhqd,bhkd->bhqk", qh, kh) / math.sqrt(D)
    at = jax.nn.softmax(sc, axis=-1)
    o = jnp.einsum("bhqk,bhkd->bhqd", at, vh).transpose(0, 2, 1, 3).reshape(B, S, E)
    x1 = x + (o @ wo + bo[0])

    x2n = ln(x1, ln2g, ln2b)
    h = x2n @ w1 + b1[0]
    h = 0.5 * h * (1.0 + jnp.tanh(0.7978845608028654 * (h + 0.044715 * h ** 3)))
    return x1 + (h @ w2 + b2[0])


# ---------------------------------------------------------------------------
# main
# ---------------------------------------------------------------------------
if __name__ == "__main__":
    key = jax.random.PRNGKey(0)
    keys = jax.random.split(key, 12)

    x = jax.random.normal(keys[0], (B, S, E), dtype=jnp.float32)

    def dense(k, shape, fan_in):
        bound = 1.0 / math.sqrt(fan_in)
        return jax.random.uniform(k, shape, jnp.float32, -bound, bound)

    # LayerNorm params (stored as (1, E) for 2D-friendly layout)
    ln1g = jnp.ones((1, E), jnp.float32)
    ln1b = jnp.zeros((1, E), jnp.float32)
    ln2g = jnp.ones((1, E), jnp.float32)
    ln2b = jnp.zeros((1, E), jnp.float32)

    # attention projections (W is (in, out); b is (1, out))
    wq = dense(keys[1], (E, E), E); bq = dense(keys[2], (1, E), E)
    wk = dense(keys[3], (E, E), E); bk = dense(keys[4], (1, E), E)
    wv = dense(keys[5], (E, E), E); bv = dense(keys[6], (1, E), E)
    wo = dense(keys[7], (E, E), E); bo = dense(keys[8], (1, E), E)

    # feed-forward
    w1 = dense(keys[9], (E, FF), E);  b1 = dense(keys[10], (1, FF), E)
    w2 = dense(keys[11], (FF, E), FF)
    b2 = dense(jax.random.PRNGKey(1), (1, E), FF)

    params = (ln1g, ln1b, wq, bq, wk, bk, wv, bv, wo, bo,
              ln2g, ln2b, w1, b1, w2, b2)

    out = encoder_layer(x, params)
    out = jax.block_until_ready(out)

    ref = encoder_layer_ref(x, params)
    # tolerance slightly loosened because the kernel's softmax uses the EUP
    # approximate reciprocal (pl.reciprocal(approx=True)).
    np.testing.assert_allclose(np.asarray(out), np.asarray(ref),
                               rtol=3e-3, atol=3e-3)

    print("KERNEL_OK")
</pallas_src>

<mosaic_0001>
module attributes {stable_mosaic.version = 11 : i64} {
  func.func @encoder_layer_kernel(%arg0: memref<2x8x32xf32, #tpu.memory_space<vmem>>, %arg1: memref<9x32xf32, #tpu.memory_space<vmem>>, %arg2: memref<1x64xf32, #tpu.memory_space<vmem>>, %arg3: memref<32x96xf32, #tpu.memory_space<vmem>>, %arg4: memref<32x32xf32, #tpu.memory_space<vmem>>, %arg5: memref<32x64xf32, #tpu.memory_space<vmem>>, %arg6: memref<64x32xf32, #tpu.memory_space<vmem>>, %arg7: memref<2x8x32xf32, #tpu.memory_space<vmem>>) attributes {dimension_semantics = [], scalar_prefetch = 0 : i64, scratch_operands = 0 : i64, tpu.core_type = #tpu.core_type<tc>} {
    %c0 = arith.constant 0 : index
    %c0_0 = arith.constant 0 : index
    %0 = vector.load %arg1[%c0, %c0_0] : memref<9x32xf32, #tpu.memory_space<vmem>>, vector<9x32xf32>
    %c0_1 = arith.constant 0 : index
    %c0_2 = arith.constant 0 : index
    %c0_3 = arith.constant 0 : index
    %1 = vector.load %arg0[%c0_1, %c0_2, %c0_3] : memref<2x8x32xf32, #tpu.memory_space<vmem>>, vector<2x8x32xf32>
    %2 = vector.shape_cast %1 : vector<2x8x32xf32> to vector<16x32xf32>
    %3 = vector.extract_strided_slice %0 {offsets = [0, 0], sizes = [1, 32], strides = [1, 1]} : vector<9x32xf32> to vector<1x32xf32>
    %4 = vector.extract_strided_slice %0 {offsets = [1, 0], sizes = [1, 32], strides = [1, 1]} : vector<9x32xf32> to vector<1x32xf32>
    %cst = arith.constant dense<0.000000e+00> : vector<16xf32>
    %5 = vector.multi_reduction <add>, %2, %cst [1] : vector<16x32xf32> to vector<16xf32>
    %6 = vector.shape_cast %5 : vector<16xf32> to vector<16x1xf32>
    %cst_4 = arith.constant 3.200000e+01 : f32
    %7 = vector.broadcast %cst_4 : f32 to vector<16x1xf32>
    %8 = arith.divf %6, %7 : vector<16x1xf32>
    %9 = vector.broadcast %8 : vector<16x1xf32> to vector<16x32xf32>
    %10 = arith.subf %2, %9 : vector<16x32xf32>
    %11 = arith.mulf %10, %10 : vector<16x32xf32>
    %cst_5 = arith.constant dense<0.000000e+00> : vector<16xf32>
    %12 = vector.multi_reduction <add>, %11, %cst_5 [1] : vector<16x32xf32> to vector<16xf32>
    %13 = vector.shape_cast %12 : vector<16xf32> to vector<16x1xf32>
    %cst_6 = arith.constant 3.200000e+01 : f32
    %14 = vector.broadcast %cst_6 : f32 to vector<16x1xf32>
    %15 = arith.divf %13, %14 : vector<16x1xf32>
    %16 = vector.broadcast %8 : vector<16x1xf32> to vector<16x32xf32>
    %17 = arith.subf %2, %16 : vector<16x32xf32>
    %cst_7 = arith.constant 9.99999974E-6 : f32
    %18 = vector.broadcast %cst_7 : f32 to vector<16x1xf32>
    %19 = arith.addf %15, %18 : vector<16x1xf32>
    %20 = math.rsqrt %19 : vector<16x1xf32>
    %21 = vector.broadcast %20 : vector<16x1xf32> to vector<16x32xf32>
    %22 = arith.mulf %17, %21 : vector<16x32xf32>
    %23 = vector.broadcast %3 : vector<1x32xf32> to vector<16x32xf32>
    %24 = arith.mulf %22, %23 : vector<16x32xf32>
    %25 = vector.broadcast %4 : vector<1x32xf32> to vector<16x32xf32>
    %26 = arith.addf %24, %25 : vector<16x32xf32>
    %c0_8 = arith.constant 0 : index
    %c0_9 = arith.constant 0 : index
    %27 = vector.load %arg3[%c0_8, %c0_9] : memref<32x96xf32, #tpu.memory_space<vmem>>, vector<32x96xf32>
    %cst_10 = arith.constant dense<0.000000e+00> : vector<16x96xf32>
    %28 = tpu.matmul %26, %27, %cst_10 {dimension_numbers = #tpu.dot_dimension_numbers<[1], [0], [0], [1], [0, 0, 1, 1], [], []>} : vector<16x32xf32>, vector<32x96xf32>, vector<16x96xf32> -> vector<16x96xf32>
    %29 = vector.extract_strided_slice %28 {offsets = [0, 0], sizes = [16, 32], strides = [1, 1]} : vector<16x96xf32> to vector<16x32xf32>
    %30 = vector.extract_strided_slice %0 {offsets = [4, 0], sizes = [1, 32], strides = [1, 1]} : vector<9x32xf32> to vector<1x32xf32>
    %31 = vector.broadcast %30 : vector<1x32xf32> to vector<16x32xf32>
    %32 = arith.addf %29, %31 : vector<16x32xf32>
    %33 = vector.extract_strided_slice %28 {offsets = [0, 32], sizes = [16, 32], strides = [1, 1]} : vector<16x96xf32> to vector<16x32xf32>
    %34 = vector.extract_strided_slice %0 {offsets = [5, 0], sizes = [1, 32], strides = [1, 1]} : vector<9x32xf32> to vector<1x32xf32>
    %35 = vector.broadcast %34 : vector<1x32xf32> to vector<16x32xf32>
    %36 = arith.addf %33, %35 : vector<16x32xf32>
    %37 = vector.extract_strided_slice %28 {offsets = [0, 64], sizes = [16, 32], strides = [1, 1]} : vector<16x96xf32> to vector<16x32xf32>
    %38 = vector.extract_strided_slice %0 {offsets = [6, 0], sizes = [1, 32], strides = [1, 1]} : vector<9x32xf32> to vector<1x32xf32>
    %39 = vector.broadcast %38 : vector<1x32xf32> to vector<16x32xf32>
    %40 = arith.addf %37, %39 : vector<16x32xf32>
    %41 = vector.extract_strided_slice %32 {offsets = [0, 0], sizes = [16, 8], strides = [1, 1]} : vector<16x32xf32> to vector<16x8xf32>
    %42 = vector.shape_cast %41 : vector<16x8xf32> to vector<2x8x8xf32>
    %43 = vector.extract_strided_slice %36 {offsets = [0, 0], sizes = [16, 8], strides = [1, 1]} : vector<16x32xf32> to vector<16x8xf32>
    %44 = vector.shape_cast %43 : vector<16x8xf32> to vector<2x8x8xf32>
    %45 = vector.extract_strided_slice %40 {offsets = [0, 0], sizes = [16, 8], strides = [1, 1]} : vector<16x32xf32> to vector<16x8xf32>
    %46 = vector.shape_cast %45 : vector<16x8xf32> to vector<2x8x8xf32>
    "tpu.trace_start"() <{level = 10 : i32, message = "bqd,bkd->bqk"}> : () -> ()
    %cst_11 = arith.constant dense<0.000000e+00> : vector<2x8x8xf32>
    %47 = tpu.matmul %42, %44, %cst_11 {dimension_numbers = #tpu.dot_dimension_numbers<[2], [2], [1], [1], [0, 0, 0, 1, 1, 1], [0], [0]>} : vector<2x8x8xf32>, vector<2x8x8xf32>, vector<2x8x8xf32> -> vector<2x8x8xf32>
    "tpu.trace_stop"() : () -> ()
    %cst_12 = arith.constant dense<0xFF800000> : vector<2x8xf32>
    %48 = vector.multi_reduction <maximumf>, %47, %cst_12 [2] : vector<2x8x8xf32> to vector<2x8xf32>
    %49 = vector.shape_cast %48 : vector<2x8xf32> to vector<2x8x1xf32>
    %50 = vector.broadcast %49 : vector<2x8x1xf32> to vector<2x8x8xf32>
    %51 = arith.subf %47, %50 : vector<2x8x8xf32>
    %52 = math.exp %51 : vector<2x8x8xf32>
    %cst_13 = arith.constant dense<0.000000e+00> : vector<2x8xf32>
    %53 = vector.multi_reduction <add>, %52, %cst_13 [2] : vector<2x8x8xf32> to vector<2x8xf32>
    %54 = vector.shape_cast %53 : vector<2x8xf32> to vector<2x8x1xf32>
    %55 = tpu.reciprocal %54 {approx = true} : vector<2x8x1xf32> -> vector<2x8x1xf32>
    %56 = vector.broadcast %55 : vector<2x8x1xf32> to vector<2x8x8xf32>
    %57 = arith.mulf %52, %56 : vector<2x8x8xf32>
    "tpu.trace_start"() <{level = 10 : i32, message = "bqk,bkd->bqd"}> : () -> ()
    %cst_14 = arith.constant dense<0.000000e+00> : vector<2x8x8xf32>
    %58 = tpu.matmul %57, %46, %cst_14 {dimension_numbers = #tpu.dot_dimension_numbers<[2], [1], [1], [2], [0, 0, 0, 1, 1, 2], [0], [0]>} : vector<2x8x8xf32>, vector<2x8x8xf32>, vector<2x8x8xf32> -> vector<2x8x8xf32>
    "tpu.trace_stop"() : () -> ()
    %59 = vector.shape_cast %58 : vector<2x8x8xf32> to vector<16x8xf32>
    %60 = vector.extract_strided_slice %32 {offsets = [0, 8], sizes = [16, 8], strides = [1, 1]} : vector<16x32xf32> to vector<16x8xf32>
    %61 = vector.shape_cast %60 : vector<16x8xf32> to vector<2x8x8xf32>
    %62 = vector.extract_strided_slice %36 {offsets = [0, 8], sizes = [16, 8], strides = [1, 1]} : vector<16x32xf32> to vector<16x8xf32>
    %63 = vector.shape_cast %62 : vector<16x8xf32> to vector<2x8x8xf32>
    %64 = vector.extract_strided_slice %40 {offsets = [0, 8], sizes = [16, 8], strides = [1, 1]} : vector<16x32xf32> to vector<16x8xf32>
    %65 = vector.shape_cast %64 : vector<16x8xf32> to vector<2x8x8xf32>
    "tpu.trace_start"() <{level = 10 : i32, message = "bqd,bkd->bqk"}> : () -> ()
    %cst_15 = arith.constant dense<0.000000e+00> : vector<2x8x8xf32>
    %66 = tpu.matmul %61, %63, %cst_15 {dimension_numbers = #tpu.dot_dimension_numbers<[2], [2], [1], [1], [0, 0, 0, 1, 1, 1], [0], [0]>} : vector<2x8x8xf32>, vector<2x8x8xf32>, vector<2x8x8xf32> -> vector<2x8x8xf32>
    "tpu.trace_stop"() : () -> ()
    %cst_16 = arith.constant dense<0xFF800000> : vector<2x8xf32>
    %67 = vector.multi_reduction <maximumf>, %66, %cst_16 [2] : vector<2x8x8xf32> to vector<2x8xf32>
    %68 = vector.shape_cast %67 : vector<2x8xf32> to vector<2x8x1xf32>
    %69 = vector.broadcast %68 : vector<2x8x1xf32> to vector<2x8x8xf32>
    %70 = arith.subf %66, %69 : vector<2x8x8xf32>
    %71 = math.exp %70 : vector<2x8x8xf32>
    %cst_17 = arith.constant dense<0.000000e+00> : vector<2x8xf32>
    %72 = vector.multi_reduction <add>, %71, %cst_17 [2] : vector<2x8x8xf32> to vector<2x8xf32>
    %73 = vector.shape_cast %72 : vector<2x8xf32> to vector<2x8x1xf32>
    %74 = tpu.reciprocal %73 {approx = true} : vector<2x8x1xf32> -> vector<2x8x1xf32>
    %75 = vector.broadcast %74 : vector<2x8x1xf32> to vector<2x8x8xf32>
    %76 = arith.mulf %71, %75 : vector<2x8x8xf32>
    "tpu.trace_start"() <{level = 10 : i32, message = "bqk,bkd->bqd"}> : () -> ()
    %cst_18 = arith.constant dense<0.000000e+00> : vector<2x8x8xf32>
    %77 = tpu.matmul %76, %65, %cst_18 {dimension_numbers = #tpu.dot_dimension_numbers<[2], [1], [1], [2], [0, 0, 0, 1, 1, 2], [0], [0]>} : vector<2x8x8xf32>, vector<2x8x8xf32>, vector<2x8x8xf32> -> vector<2x8x8xf32>
    "tpu.trace_stop"() : () -> ()
    %78 = vector.shape_cast %77 : vector<2x8x8xf32> to vector<16x8xf32>
    %79 = vector.extract_strided_slice %32 {offsets = [0, 16], sizes = [16, 8], strides = [1, 1]} : vector<16x32xf32> to vector<16x8xf32>
    %80 = vector.shape_cast %79 : vector<16x8xf32> to vector<2x8x8xf32>
    %81 = vector.extract_strided_slice %36 {offsets = [0, 16], sizes = [16, 8], strides = [1, 1]} : vector<16x32xf32> to vector<16x8xf32>
    %82 = vector.shape_cast %81 : vector<16x8xf32> to vector<2x8x8xf32>
    %83 = vector.extract_strided_slice %40 {offsets = [0, 16], sizes = [16, 8], strides = [1, 1]} : vector<16x32xf32> to vector<16x8xf32>
    %84 = vector.shape_cast %83 : vector<16x8xf32> to vector<2x8x8xf32>
    "tpu.trace_start"() <{level = 10 : i32, message = "bqd,bkd->bqk"}> : () -> ()
    %cst_19 = arith.constant dense<0.000000e+00> : vector<2x8x8xf32>
    %85 = tpu.matmul %80, %82, %cst_19 {dimension_numbers = #tpu.dot_dimension_numbers<[2], [2], [1], [1], [0, 0, 0, 1, 1, 1], [0], [0]>} : vector<2x8x8xf32>, vector<2x8x8xf32>, vector<2x8x8xf32> -> vector<2x8x8xf32>
    "tpu.trace_stop"() : () -> ()
    %cst_20 = arith.constant dense<0xFF800000> : vector<2x8xf32>
    %86 = vector.multi_reduction <maximumf>, %85, %cst_20 [2] : vector<2x8x8xf32> to vector<2x8xf32>
    %87 = vector.shape_cast %86 : vector<2x8xf32> to vector<2x8x1xf32>
    %88 = vector.broadcast %87 : vector<2x8x1xf32> to vector<2x8x8xf32>
    %89 = arith.subf %85, %88 : vector<2x8x8xf32>
    %90 = math.exp %89 : vector<2x8x8xf32>
    %cst_21 = arith.constant dense<0.000000e+00> : vector<2x8xf32>
    %91 = vector.multi_reduction <add>, %90, %cst_21 [2] : vector<2x8x8xf32> to vector<2x8xf32>
    %92 = vector.shape_cast %91 : vector<2x8xf32> to vector<2x8x1xf32>
    %93 = tpu.reciprocal %92 {approx = true} : vector<2x8x1xf32> -> vector<2x8x1xf32>
    %94 = vector.broadcast %93 : vector<2x8x1xf32> to vector<2x8x8xf32>
    %95 = arith.mulf %90, %94 : vector<2x8x8xf32>
    "tpu.trace_start"() <{level = 10 : i32, message = "bqk,bkd->bqd"}> : () -> ()
    %cst_22 = arith.constant dense<0.000000e+00> : vector<2x8x8xf32>
    %96 = tpu.matmul %95, %84, %cst_22 {dimension_numbers = #tpu.dot_dimension_numbers<[2], [1], [1], [2], [0, 0, 0, 1, 1, 2], [0], [0]>} : vector<2x8x8xf32>, vector<2x8x8xf32>, vector<2x8x8xf32> -> vector<2x8x8xf32>
    "tpu.trace_stop"() : () -> ()
    %97 = vector.shape_cast %96 : vector<2x8x8xf32> to vector<16x8xf32>
    %98 = vector.extract_strided_slice %32 {offsets = [0, 24], sizes = [16, 8], strides = [1, 1]} : vector<16x32xf32> to vector<16x8xf32>
    %99 = vector.shape_cast %98 : vector<16x8xf32> to vector<2x8x8xf32>
    %100 = vector.extract_strided_slice %36 {offsets = [0, 24], sizes = [16, 8], strides = [1, 1]} : vector<16x32xf32> to vector<16x8xf32>
    %101 = vector.shape_cast %100 : vector<16x8xf32> to vector<2x8x8xf32>
    %102 = vector.extract_strided_slice %40 {offsets = [0, 24], sizes = [16, 8], strides = [1, 1]} : vector<16x32xf32> to vector<16x8xf32>
    %103 = vector.shape_cast %102 : vector<16x8xf32> to vector<2x8x8xf32>
    "tpu.trace_start"() <{level = 10 : i32, message = "bqd,bkd->bqk"}> : () -> ()
    %cst_23 = arith.constant dense<0.000000e+00> : vector<2x8x8xf32>
    %104 = tpu.matmul %99, %101, %cst_23 {dimension_numbers = #tpu.dot_dimension_numbers<[2], [2], [1], [1], [0, 0, 0, 1, 1, 1], [0], [0]>} : vector<2x8x8xf32>, vector<2x8x8xf32>, vector<2x8x8xf32> -> vector<2x8x8xf32>
    "tpu.trace_stop"() : () -> ()
    %cst_24 = arith.constant dense<0xFF800000> : vector<2x8xf32>
    %105 = vector.multi_reduction <maximumf>, %104, %cst_24 [2] : vector<2x8x8xf32> to vector<2x8xf32>
    %106 = vector.shape_cast %105 : vector<2x8xf32> to vector<2x8x1xf32>
    %107 = vector.broadcast %106 : vector<2x8x1xf32> to vector<2x8x8xf32>
    %108 = arith.subf %104, %107 : vector<2x8x8xf32>
    %109 = math.exp %108 : vector<2x8x8xf32>
    %cst_25 = arith.constant dense<0.000000e+00> : vector<2x8xf32>
    %110 = vector.multi_reduction <add>, %109, %cst_25 [2] : vector<2x8x8xf32> to vector<2x8xf32>
    %111 = vector.shape_cast %110 : vector<2x8xf32> to vector<2x8x1xf32>
    %112 = tpu.reciprocal %111 {approx = true} : vector<2x8x1xf32> -> vector<2x8x1xf32>
    %113 = vector.broadcast %112 : vector<2x8x1xf32> to vector<2x8x8xf32>
    %114 = arith.mulf %109, %113 : vector<2x8x8xf32>
    "tpu.trace_start"() <{level = 10 : i32, message = "bqk,bkd->bqd"}> : () -> ()
    %cst_26 = arith.constant dense<0.000000e+00> : vector<2x8x8xf32>
    %115 = tpu.matmul %114, %103, %cst_26 {dimension_numbers = #tpu.dot_dimension_numbers<[2], [1], [1], [2], [0, 0, 0, 1, 1, 2], [0], [0]>} : vector<2x8x8xf32>, vector<2x8x8xf32>, vector<2x8x8xf32> -> vector<2x8x8xf32>
    "tpu.trace_stop"() : () -> ()
    %116 = vector.shape_cast %115 : vector<2x8x8xf32> to vector<16x8xf32>
    %117 = tpu.concatenate %59, %78, %97, %116 in 1 : vector<16x8xf32>, vector<16x8xf32>, vector<16x8xf32>, vector<16x8xf32> -> vector<16x32xf32>
    %c0_27 = arith.constant 0 : index
    %c0_28 = arith.constant 0 : index
    %118 = vector.load %arg4[%c0_27, %c0_28] : memref<32x32xf32, #tpu.memory_space<vmem>>, vector<32x32xf32>
    %cst_29 = arith.constant dense<0.000000e+00> : vector<16x32xf32>
    %119 = tpu.matmul %117, %118, %cst_29 {dimension_numbers = #tpu.dot_dimension_numbers<[1], [0], [0], [1], [0, 0, 1, 1], [], []>} : vector<16x32xf32>, vector<32x32xf32>, vector<16x32xf32> -> vector<16x32xf32>
    %120 = vector.extract_strided_slice %0 {offsets = [7, 0], sizes = [1, 32], strides = [1, 1]} : vector<9x32xf32> to vector<1x32xf32>
    %121 = vector.broadcast %120 : vector<1x32xf32> to vector<16x32xf32>
    %122 = arith.addf %119, %121 : vector<16x32xf32>
    %123 = arith.addf %2, %122 : vector<16x32xf32>
    %124 = vector.extract_strided_slice %0 {offsets = [2, 0], sizes = [1, 32], strides = [1, 1]} : vector<9x32xf32> to vector<1x32xf32>
    %125 = vector.extract_strided_slice %0 {offsets = [3, 0], sizes = [1, 32], strides = [1, 1]} : vector<9x32xf32> to vector<1x32xf32>
    %cst_30 = arith.constant dense<0.000000e+00> : vector<16xf32>
    %126 = vector.multi_reduction <add>, %123, %cst_30 [1] : vector<16x32xf32> to vector<16xf32>
    %127 = vector.shape_cast %126 : vector<16xf32> to vector<16x1xf32>
    %cst_31 = arith.constant 3.200000e+01 : f32
    %128 = vector.broadcast %cst_31 : f32 to vector<16x1xf32>
    %129 = arith.divf %127, %128 : vector<16x1xf32>
    %130 = vector.broadcast %129 : vector<16x1xf32> to vector<16x32xf32>
    %131 = arith.subf %123, %130 : vector<16x32xf32>
    %132 = arith.mulf %131, %131 : vector<16x32xf32>
    %cst_32 = arith.constant dense<0.000000e+00> : vector<16xf32>
    %133 = vector.multi_reduction <add>, %132, %cst_32 [1] : vector<16x32xf32> to vector<16xf32>
    %134 = vector.shape_cast %133 : vector<16xf32> to vector<16x1xf32>
    %cst_33 = arith.constant 3.200000e+01 : f32
    %135 = vector.broadcast %cst_33 : f32 to vector<16x1xf32>
    %136 = arith.divf %134, %135 : vector<16x1xf32>
    %137 = vector.broadcast %129 : vector<16x1xf32> to vector<16x32xf32>
    %138 = arith.subf %123, %137 : vector<16x32xf32>
    %cst_34 = arith.constant 9.99999974E-6 : f32
    %139 = vector.broadcast %cst_34 : f32 to vector<16x1xf32>
    %140 = arith.addf %136, %139 : vector<16x1xf32>
    %141 = math.rsqrt %140 : vector<16x1xf32>
    %142 = vector.broadcast %141 : vector<16x1xf32> to vector<16x32xf32>
    %143 = arith.mulf %138, %142 : vector<16x32xf32>
    %144 = vector.broadcast %124 : vector<1x32xf32> to vector<16x32xf32>
    %145 = arith.mulf %143, %144 : vector<16x32xf32>
    %146 = vector.broadcast %125 : vector<1x32xf32> to vector<16x32xf32>
    %147 = arith.addf %145, %146 : vector<16x32xf32>
    %c0_35 = arith.constant 0 : index
    %c0_36 = arith.constant 0 : index
    %148 = vector.load %arg5[%c0_35, %c0_36] : memref<32x64xf32, #tpu.memory_space<vmem>>, vector<32x64xf32>
    %cst_37 = arith.constant dense<0.000000e+00> : vector<16x64xf32>
    %149 = tpu.matmul %147, %148, %cst_37 {dimension_numbers = #tpu.dot_dimension_numbers<[1], [0], [0], [1], [0, 0, 1, 1], [], []>} : vector<16x32xf32>, vector<32x64xf32>, vector<16x64xf32> -> vector<16x64xf32>
    %c0_38 = arith.constant 0 : index
    %c0_39 = arith.constant 0 : index
    %150 = vector.load %arg2[%c0_38, %c0_39] : memref<1x64xf32, #tpu.memory_space<vmem>>, vector<1x64xf32>
    %151 = vector.broadcast %150 : vector<1x64xf32> to vector<16x64xf32>
    %152 = arith.addf %149, %151 : vector<16x64xf32>
    %cst_40 = arith.constant 5.000000e-01 : f32
    %153 = vector.broadcast %cst_40 : f32 to vector<16x64xf32>
    %154 = arith.mulf %153, %152 : vector<16x64xf32>
    %cst_41 = arith.constant 4.471500e-02 : f32
    %155 = vector.broadcast %cst_41 : f32 to vector<16x64xf32>
    %156 = arith.mulf %155, %152 : vector<16x64xf32>
    %157 = arith.mulf %156, %152 : vector<16x64xf32>
    %158 = arith.mulf %157, %152 : vector<16x64xf32>
    %159 = arith.addf %152, %158 : vector<16x64xf32>
    %cst_42 = arith.constant 0.797884583 : f32
    %160 = vector.broadcast %cst_42 : f32 to vector<16x64xf32>
    %161 = arith.mulf %160, %159 : vector<16x64xf32>
    %162 = math.tanh %161 : vector<16x64xf32>
    %cst_43 = arith.constant 1.000000e+00 : f32
    %163 = vector.broadcast %cst_43 : f32 to vector<16x64xf32>
    %164 = arith.addf %163, %162 : vector<16x64xf32>
    %165 = arith.mulf %154, %164 : vector<16x64xf32>
    %c0_44 = arith.constant 0 : index
    %c0_45 = arith.constant 0 : index
    %166 = vector.load %arg6[%c0_44, %c0_45] : memref<64x32xf32, #tpu.memory_space<vmem>>, vector<64x32xf32>
    %cst_46 = arith.constant dense<0.000000e+00> : vector<16x32xf32>
    %167 = tpu.matmul %165, %166, %cst_46 {dimension_numbers = #tpu.dot_dimension_numbers<[1], [0], [0], [1], [0, 0, 1, 1], [], []>} : vector<16x64xf32>, vector<64x32xf32>, vector<16x32xf32> -> vector<16x32xf32>
    %168 = vector.extract_strided_slice %0 {offsets = [8, 0], sizes = [1, 32], strides = [1, 1]} : vector<9x32xf32> to vector<1x32xf32>
    %169 = vector.broadcast %168 : vector<1x32xf32> to vector<16x32xf32>
    %170 = arith.addf %167, %169 : vector<16x32xf32>
    %171 = arith.addf %123, %170 : vector<16x32xf32>
    %172 = vector.shape_cast %171 : vector<16x32xf32> to vector<2x8x32xf32>
    %c0_47 = arith.constant 0 : index
    %c0_48 = arith.constant 0 : index
    %c0_49 = arith.constant 0 : index
    %173 = vector.load %arg7[%c0_47, %c0_48, %c0_49] : memref<2x8x32xf32, #tpu.memory_space<vmem>>, vector<2x8x32xf32>
    tpu.vector_store %arg7[%c0_47, %c0_48, %c0_49], %172 {strides = array<i32>} : memref<2x8x32xf32, #tpu.memory_space<vmem>>, vector<2x8x32xf32>,
    return
  }
}

</mosaic_0001>

<llo_original>
// kernel: tpu_custom_call.1
$region0: #{tpu_custom_call.1}
  #allocation0 [shape = 'u32[]', space=smem, size = 0x4, offset = 0x4, fixed_abs, tag = 'smem constant byte address 0x4 - core index']
  #allocation1 [shape = 'u32[144,128]{1,0:T(1,128)}', space=vmem, size = 0x12000, scoped, tag = 'internal scratch']
  %s0 = inlined_call_operand.hbm [shape: f32[2,8,32], index: 0, kind: input, shape index: {}]
  %s1 = inlined_call_operand.hbm [shape: f32[9,32], index: 1, kind: input, shape index: {}]
  %s2 = inlined_call_operand.vmem [shape: f32[1,64], index: 2, kind: input, shape index: {}]
  %s3 = inlined_call_operand.vmem [shape: f32[32,96], index: 3, kind: input, shape index: {}]
  %s4 = inlined_call_operand.vmem [shape: f32[32,32], index: 4, kind: input, shape index: {}]
  %s5 = inlined_call_operand.vmem [shape: f32[32,64], index: 5, kind: input, shape index: {}]
  %s6 = inlined_call_operand.vmem [shape: f32[64,32], index: 6, kind: input, shape index: {}]
  %s7 = inlined_call_operand.hbm [shape: f32[2,8,32], index: 7, kind: output, shape index: {}]
  %s8 = sld [smem:[#allocation0]]
  $region46: #{tpu_custom_call.1} parent=0
    _
  %s10 = ssub.s32 1, %s8
  %s11 = scalar_select 0, %s10, %s8
  $region1: #{tpu_custom_call.1} parent=0
    #allocation2 [shape = 'u8[8192]{0}', space=vmem, size = 0x2000, scoped, tag = 'input window, operand 0, single buffered']
    #allocation3 [shape = 's32[1]{0}', space=sflag, size = 0x4, scoped, tag = 'scoped memory for tpu_custom_call.1']
    #allocation4 [shape = 's32[1]{0}', space=sflag, size = 0x4, scoped, tag = 'scoped memory for tpu_custom_call.1']
    #allocation5 [shape = 'u8[8192]{0}', space=vmem, size = 0x2000, scoped, tag = 'input window, operand 1, single buffered']
    #allocation6 [shape = 's32[1]{0}', space=sflag, size = 0x4, scoped, tag = 'scoped memory for tpu_custom_call.1']
    #allocation7 [shape = 'u8[8192]{0}', space=vmem, size = 0x2000, scoped, tag = 'output window, operand 0, single buffered']
    %12 = vsyncpa [#allocation3], 0
    %13 = vsyncpa [#allocation6], 0
    %14 = vsyncpa [#allocation4], 0
    // Predicated region
    $region2: #{tpu_custom_call.1} parent=1 // pred_check
      _
    $region3: #{tpu_custom_call.1} parent=1 // pred_check_branch
      %16 = sbr.rel (0) target = $region5
    $region4: #{tpu_custom_call.1} parent=1 // pred_region
      %s18 = ssub.s32 256, 256
      %19 = vsyncadd [#allocation3], %s18
      %s20 = sshll.u32 [#allocation2], 4
      %s21 = int_to_ptr.vmem [resolvable:$true] %s20
      %26 = dma.hbm_to_vmem [thread:$0]  %s0, 256, %s21, [#allocation3], 128, 128, 8
    $region5: #{tpu_custom_call.1} parent=1 // pred_fallthru
      _
    // Predicated region
    $region6: #{tpu_custom_call.1} parent=1 // pred_check
      _
    $region7: #{tpu_custom_call.1} parent=1 // pred_check_branch
      %28 = sbr.rel (0) target = $region9
    $region8: #{tpu_custom_call.1} parent=1 // pred_region
      %s30 = ssub.s32 256, 256
      %31 = vsyncadd [#allocation6], %s30
      %s32 = sshll.u32 [#allocation5], 4
      %s33 = int_to_ptr.vmem [resolvable:$true] %s32
      %38 = dma.hbm_to_vmem [thread:$0]  %s1, 256, %s33, [#allocation6], 128, 128, 8
    $region9: #{tpu_custom_call.1} parent=1 // pred_fallthru
      _
    // Predicated region
    $region10: #{tpu_custom_call.1} parent=1 // pred_check
      _
    $region11: #{tpu_custom_call.1} parent=1 // pred_check_branch
      %40 = sbr.rel (0) target = $region13
    $region12: #{tpu_custom_call.1} parent=1 // pred_region
      _
    $region13: #{tpu_custom_call.1} parent=1 // pred_fallthru
      _
    // Predicated region
    $region14: #{tpu_custom_call.1} parent=1 // pred_check
      _
    $region15: #{tpu_custom_call.1} parent=1 // pred_check_branch
      %42 = sbr.rel (0) target = $region17
    $region16: #{tpu_custom_call.1} parent=1 // pred_region
      _
    $region17: #{tpu_custom_call.1} parent=1 // pred_fallthru
      _
    // Predicated region
    $region18: #{tpu_custom_call.1} parent=1 // pred_check
      _
    $region19: #{tpu_custom_call.1} parent=1 // pred_check_branch
      %44 = sbr.rel (0) target = $region21
    $region20: #{tpu_custom_call.1} parent=1 // pred_region
      _
    $region21: #{tpu_custom_call.1} parent=1 // pred_fallthru
      _
    // Predicated region
    $region22: #{tpu_custom_call.1} parent=1 // pred_check
      _
    $region23: #{tpu_custom_call.1} parent=1 // pred_check_branch
      %46 = sbr.rel (0) target = $region25
    $region24: #{tpu_custom_call.1} parent=1 // pred_region
      _
    $region25: #{tpu_custom_call.1} parent=1 // pred_fallthru
      _
    // Predicated region
    $region26: #{tpu_custom_call.1} parent=1 // pred_check
      _
    $region27: #{tpu_custom_call.1} parent=1 // pred_check_branch
      %48 = sbr.rel (0) target = $region29
    $region28: #{tpu_custom_call.1} parent=1 // pred_region
      _
    $region29: #{tpu_custom_call.1} parent=1 // pred_fallthru
      _
    // Predicated region
    $region30: #{tpu_custom_call.1} parent=1 // pred_check
      _
    $region31: #{tpu_custom_call.1} parent=1 // pred_check_branch
      %50 = sbr.rel (0) target = $region33
    $region32: #{tpu_custom_call.1} parent=1 // pred_region
      %51 = dma.done [#allocation3], 256
    $region33: #{tpu_custom_call.1} parent=1 // pred_fallthru
      _
    // Predicated region
    $region34: #{tpu_custom_call.1} parent=1 // pred_check
      _
    $region35: #{tpu_custom_call.1} parent=1 // pred_check_branch
      %53 = sbr.rel (0) target = $region37
    $region36: #{tpu_custom_call.1} parent=1 // pred_region
      %54 = dma.done [#allocation6], 256
    $region37: #{tpu_custom_call.1} parent=1 // pred_fallthru
      _
    %v55 = vld [vmem:[#allocation5] sm:$0xff]
    %v56 = vld [vmem:[#allocation5 + $0x8] sm:$0x1]
    %v57 = vld [vmem:[#allocation2] sm:$0xff]
    %v58 = vld [vmem:[#allocation2 + $0x8] sm:$0xff]
    %vm59 = vcmask 261120
    %v60 = vsel %vm59, %v57, 0.0
    %61 = vadd.xlane.f32.xlu0 %v60
    %v62 = vpop.xlane.xlu0 %61
    %v63 = vsel %vm59, %v58, 0.0
    %64 = vadd.xlane.f32.xlu0 %v63
    %v65 = vpop.xlane.xlu0 %64
    %v66 = vrcp.pop 32.0
    %v67 = vmul.f32 %v62, %v66
    %v68 = vmul.f32 %v65, %v66
    %v69 = vsub.f32 %v57, %v67
    %v70 = vsub.f32 %v58, %v68
    %v71 = vmul.f32 %v69, %v69
    %v72 = vmul.f32 %v70, %v70
    %v73 = vsel %vm59, %v71, 0.0
    %74 = vadd.xlane.f32.xlu0 %v73
    %v75 = vpop.xlane.xlu0 %74
    %v76 = vsel %vm59, %v72, 0.0
    %77 = vadd.xlane.f32.xlu0 %v76
    %v78 = vpop.xlane.xlu0 %77
    %v79 = vmul.f32 %v75, %v66
    %v80 = vmul.f32 %v78, %v66
    %v81 = vadd.f32 %v79, 1e-05
    %v82 = vadd.f32 %v80, 1e-05
    %v83 = vrsqrt.pop %v81
    %v84 = vrsqrt.pop %v82
    %v85 = vmul.f32 %v69, %v83
    %v86 = vmul.f32 %v70, %v84
    %v87 = vlaneseq
    %v88 = vshrl.u32 %v87, 7
    %v89 = vsub.s32 0, %v88
    %v90 = vrot.slane %v55, %v89
    %v91 = vmul.f32 %v85, %v90
    %v92 = vmul.f32 %v86, %v90
    %v93 = vlaneseq
    %v94 = vshrl.u32 %v93, 7
    %v95 = vsub.s32 1, %v94
    %v96 = vrot.slane %v55, %v95
    %v97 = vadd.f32 %v91, %v96
    %v98 = vadd.f32 %v92, %v96
    %v99 = vld [vmem:[%s3] sm:$0xff]
    %v100 = vld [vmem:[%s3 + $0x8] sm:$0xff]
    %v101 = vld [vmem:[%s3 + $0x10] sm:$0xff]
    %v102 = vld [vmem:[%s3 + $0x18] sm:$0xff]
    %v104 = vsel %vm59, %v97, 0
    %v107 = vsel %vm59, %v98, 0
    %109 = vmatprep.subr.mxu0 0.0
    %110 = vmatpush1.msra.mxu0 %v99
    %111 = vmatprep.subr.mxu0 0.0
    %112 = vmatpush1.msra.mxu0 %v100
    %113 = vmatprep.subr.mxu0 0.0
    %114 = vmatpush1.msra.mxu0 %v101
    %115 = vmatprep.subr.mxu0 0.0
    %116 = vmatpush1.msra.mxu0 %v102
    %117 = vmatprep.subr.mxu0 0.0
    %118 = vmatpush1.msra.mxu0 0.0
    %119 = vmatprep.subr.mxu0 0.0
    %120 = vmatpush1.msra.mxu0 0.0
    %121 = vmatprep.subr.mxu0 0.0
    %122 = vmatpush1.msra.mxu0 0.0
    %123 = vmatprep.subr.mxu0 0.0
    %124 = vmatpush1.msra.mxu0 0.0
    %125 = vmatprep.subr.mxu0 0.0
    %126 = vmatpush1.msra.mxu0 0.0
    %127 = vmatprep.subr.mxu0 0.0
    %128 = vmatpush1.msra.mxu0 0.0
    %129 = vmatprep.subr.mxu0 0.0
    %130 = vmatpush1.msra.mxu0 0.0
    %131 = vmatprep.subr.mxu0 0.0
    %132 = vmatpush1.msra.mxu0 0.0
    %133 = vmatprep.subr.mxu0 0.0
    %134 = vmatpush1.msra.mxu0 0.0
    %135 = vmatprep.subr.mxu0 0.0
    %136 = vmatpush1.msra.mxu0 0.0
    %137 = vmatprep.subr.mxu0 0.0
    %138 = vmatpush1.msra.mxu0 0.0
    %139 = vmatprep.subr.mxu0 0.0
    %140 = vmatpush1.msra.mxu0 0.0
    %141 = vmatprep.subr.mxu0 0.0
    %142 = vmatpush1.msra.mxu0 0.0
    %143 = vmatprep.subr.mxu0 0.0
    %144 = vmatpush1.msra.mxu0 0.0
    %145 = vmatprep.subr.mxu0 0.0
    %146 = vmatpush1.msra.mxu0 0.0
    %147 = vmatprep.subr.mxu0 0.0
    %148 = vmatpush1.msra.mxu0 0.0
    %149 = vmatprep.subr.mxu0 0.0
    %150 = vmatpush1.msra.mxu0 0.0
    %151 = vmatprep.subr.mxu0 0.0
    %152 = vmatpush1.msra.mxu0 0.0
    %153 = vmatprep.subr.mxu0 0.0
    %154 = vmatpush1.msra.mxu0 0.0
    %155 = vmatprep.subr.mxu0 0.0
    %156 = vmatpush1.msra.mxu0 0.0
    %157 = vmatprep.subr.mxu0 0.0
    %158 = vmatpush1.msra.mxu0 0.0
    %159 = vmatprep.subr.mxu0 0.0
    %160 = vmatpush1.msra.mxu0 0.0
    %161 = vmatprep.subr.mxu0 0.0
    %162 = vmatpush1.msra.mxu0 0.0
    %163 = vmatprep.subr.mxu0 0.0
    %164 = vmatpush1.msra.mxu0 0.0
    %165 = vmatprep.subr.mxu0 0.0
    %166 = vmatpush1.msra.mxu0 0.0
    %167 = vmatprep.subr.mxu0 0.0
    %168 = vmatpush1.msra.mxu0 0.0
    %169 = vmatprep.subr.mxu0 0.0
    %170 = vmatpush1.msra.mxu0 0.0
    %171 = vmatprep.subr.mxu0 0.0
    %172 = vmatpush1.msra.mxu0 0.0
    %173 = vmatprep.mubr.f32.mxu0 0.0
    %174 = vmatmul.mubr.f32.gmra.mrb[0].mxu0 %v104
    %v175 = vpop.f32.mrb[0].mxu0
    %v176 = vadd.f32 0.0, %v175
    %v177 = vpop.f32.mrb[0].mxu0
    %178 = vmatprep.mubr.f32.mxu0 0.0
    %179 = vmatmul.mubr.f32.gmra.mrb[0].mxu0 %v107
    %v180 = vpop.f32.mrb[0].mxu0
    %v181 = vadd.f32 0.0, %v180
    %v182 = vpop.f32.mrb[0].mxu0
    %183 = vdwg.mxu0
    %v184 = vlaneseq
    %v185 = vshrl.u32 %v184, 7
    %v186 = vsub.s32 4, %v185
    %v187 = vrot.slane %v55, %v186
    %v188 = vadd.f32 %v176, %v187
    %v189 = vadd.f32 %v181, %v187
    %v190 = vlaneseq
    %v191 = vshrl.u32 %v190, 7
    %v192 = vsub.s32 5, %v191
    %v193 = vrot.slane %v55, %v192
    %195 = vrot.lane.b32.xlu0 %v193, 32
    %v196 = vpop.permute.xlu0 %195
    %v198 = vadd.f32 %v176, %v196
    %v199 = vadd.f32 %v181, %v196
    %v200 = vlaneseq
    %v201 = vshrl.u32 %v200, 7
    %v202 = vsub.s32 6, %v201
    %v203 = vrot.slane %v55, %v202
    %205 = vrot.lane.b32.xlu0 %v203, 64
    %v206 = vpop.permute.xlu0 %205
    %v208 = vadd.f32 %v176, %v206
    %v209 = vadd.f32 %v181, %v206
    %211 = vrot.lane.b32.xlu0 %v198, 96
    %v212 = vpop.permute.xlu0 %211
    %vm213 = vcmask 64512
    %v215 = vsel %vm213, %v188, 0
    %v217 = vsel %vm213, %v212, 0
    %219 = vmatprep.subr.mxu0 0.0
    %220 = vmatpush1.xpose.msra.mxu0 %v217
    %221 = vmatprep.subr.mxu0 0.0
    %222 = vmatpush1.xpose.msra.mxu0 0.0
    %223 = vmatprep.subr.mxu0 0.0
    %224 = vmatpush1.xpose.msra.mxu0 0.0
    %225 = vmatprep.subr.mxu0 0.0
    %226 = vmatpush1.xpose.msra.mxu0 0.0
    %227 = vmatprep.subr.mxu0 0.0
    %228 = vmatpush1.xpose.msra.mxu0 0.0
    %229 = vmatprep.subr.mxu0 0.0
    %230 = vmatpush1.xpose.msra.mxu0 0.0
    %231 = vmatprep.subr.mxu0 0.0
    %232 = vmatpush1.xpose.msra.mxu0 0.0
    %233 = vmatprep.subr.mxu0 0.0
    %234 = vmatpush1.xpose.msra.mxu0 0.0
    %235 = vmatprep.subr.mxu0 0.0
    %236 = vmatpush1.xpose.msra.mxu0 0.0
    %237 = vmatprep.subr.mxu0 0.0
    %238 = vmatpush1.xpose.msra.mxu0 0.0
    %239 = vmatprep.subr.mxu0 0.0
    %240 = vmatpush1.xpose.msra.mxu0 0.0
    %241 = vmatprep.subr.mxu0 0.0
    %242 = vmatpush1.xpose.msra.mxu0 0.0
    %243 = vmatprep.subr.mxu0 0.0
    %244 = vmatpush1.xpose.msra.mxu0 0.0
    %245 = vmatprep.subr.mxu0 0.0
    %246 = vmatpush1.xpose.msra.mxu0 0.0
    %247 = vmatprep.subr.mxu0 0.0
    %248 = vmatpush1.xpose.msra.mxu0 0.0
    %249 = vmatprep.subr.mxu0 0.0
    %250 = vmatpush1.xpose.msra.mxu0 0.0
    %251 = vmatprep.subr.mxu0 0.0
    %252 = vmatpush1.xpose.msra.mxu0 0.0
    %253 = vmatprep.subr.mxu0 0.0
    %254 = vmatpush1.xpose.msra.mxu0 0.0
    %255 = vmatprep.subr.mxu0 0.0
    %256 = vmatpush1.xpose.msra.mxu0 0.0
    %257 = vmatprep.subr.mxu0 0.0
    %258 = vmatpush1.xpose.msra.mxu0 0.0
    %259 = vmatprep.subr.mxu0 0.0
    %260 = vmatpush1.xpose.msra.mxu0 0.0
    %261 = vmatprep.subr.mxu0 0.0
    %262 = vmatpush1.xpose.msra.mxu0 0.0
    %263 = vmatprep.subr.mxu0 0.0
    %264 = vmatpush1.xpose.msra.mxu0 0.0
    %265 = vmatprep.subr.mxu0 0.0
    %266 = vmatpush1.xpose.msra.mxu0 0.0
    %267 = vmatprep.subr.mxu0 0.0
    %268 = vmatpush1.xpose.msra.mxu0 0.0
    %269 = vmatprep.subr.mxu0 0.0
    %270 = vmatpush1.xpose.msra.mxu0 0.0
    %271 = vmatprep.subr.mxu0 0.0
    %272 = vmatpush1.xpose.msra.mxu0 0.0
    %273 = vmatprep.subr.mxu0 0.0
    %274 = vmatpush1.xpose.msra.mxu0 0.0
    %275 = vmatprep.subr.mxu0 0.0
    %276 = vmatpush1.xpose.msra.mxu0 0.0
    %277 = vmatprep.subr.mxu0 0.0
    %278 = vmatpush1.xpose.msra.mxu0 0.0
    %279 = vmatprep.subr.mxu0 0.0
    %280 = vmatpush1.xpose.msra.mxu0 0.0
    %281 = vmatprep.subr.mxu0 0.0
    %282 = vmatpush1.xpose.msra.mxu0 0.0
    %283 = vmatprep.mubr.f32.mxu0 0.0
    %284 = vmatmul.mubr.f32.gmra.mrb[0].mxu0 %v215
    %v285 = vpop.f32.mrb[0].mxu0
    %v286 = vadd.f32 0.0, %v285
    %v287 = vpop.f32.mrb[0].mxu0
    %288 = vdwg.mxu0
    %290 = vrot.lane.b32.xlu0 %v199, 96
    %v291 = vpop.permute.xlu0 %290
    %v293 = vsel %vm213, %v189, 0
    %v295 = vsel %vm213, %v291, 0
    %297 = vmatprep.subr.mxu0 0.0
    %298 = vmatpush1.xpose.msra.mxu0 %v295
    %299 = vmatprep.subr.mxu0 0.0
    %300 = vmatpush1.xpose.msra.mxu0 0.0
    %301 = vmatprep.subr.mxu0 0.0
    %302 = vmatpush1.xpose.msra.mxu0 0.0
    %303 = vmatprep.subr.mxu0 0.0
    %304 = vmatpush1.xpose.msra.mxu0 0.0
    %305 = vmatprep.subr.mxu0 0.0
    %306 = vmatpush1.xpose.msra.mxu0 0.0
    %307 = vmatprep.subr.mxu0 0.0
    %308 = vmatpush1.xpose.msra.mxu0 0.0
    %309 = vmatprep.subr.mxu0 0.0
    %310 = vmatpush1.xpose.msra.mxu0 0.0
    %311 = vmatprep.subr.mxu0 0.0
    %312 = vmatpush1.xpose.msra.mxu0 0.0
    %313 = vmatprep.subr.mxu0 0.0
    %314 = vmatpush1.xpose.msra.mxu0 0.0
    %315 = vmatprep.subr.mxu0 0.0
    %316 = vmatpush1.xpose.msra.mxu0 0.0
    %317 = vmatprep.subr.mxu0 0.0
    %318 = vmatpush1.xpose.msra.mxu0 0.0
    %319 = vmatprep.subr.mxu0 0.0
    %320 = vmatpush1.xpose.msra.mxu0 0.0
    %321 = vmatprep.subr.mxu0 0.0
    %322 = vmatpush1.xpose.msra.mxu0 0.0
    %323 = vmatprep.subr.mxu0 0.0
    %324 = vmatpush1.xpose.msra.mxu0 0.0
    %325 = vmatprep.subr.mxu0 0.0
    %326 = vmatpush1.xpose.msra.mxu0 0.0
    %327 = vmatprep.subr.mxu0 0.0
    %328 = vmatpush1.xpose.msra.mxu0 0.0
    %329 = vmatprep.subr.mxu0 0.0
    %330 = vmatpush1.xpose.msra.mxu0 0.0
    %331 = vmatprep.subr.mxu0 0.0
    %332 = vmatpush1.xpose.msra.mxu0 0.0
    %333 = vmatprep.subr.mxu0 0.0
    %334 = vmatpush1.xpose.msra.mxu0 0.0
    %335 = vmatprep.subr.mxu0 0.0
    %336 = vmatpush1.xpose.msra.mxu0 0.0
    %337 = vmatprep.subr.mxu0 0.0
    %338 = vmatpush1.xpose.msra.mxu0 0.0
    %339 = vmatprep.subr.mxu0 0.0
    %340 = vmatpush1.xpose.msra.mxu0 0.0
    %341 = vmatprep.subr.mxu0 0.0
    %342 = vmatpush1.xpose.msra.mxu0 0.0
    %343 = vmatprep.subr.mxu0 0.0
    %344 = vmatpush1.xpose.msra.mxu0 0.0
    %345 = vmatprep.subr.mxu0 0.0
    %346 = vmatpush1.xpose.msra.mxu0 0.0
    %347 = vmatprep.subr.mxu0 0.0
    %348 = vmatpush1.xpose.msra.mxu0 0.0
    %349 = vmatprep.subr.mxu0 0.0
    %350 = vmatpush1.xpose.msra.mxu0 0.0
    %351 = vmatprep.subr.mxu0 0.0
    %352 = vmatpush1.xpose.msra.mxu0 0.0
    %353 = vmatprep.subr.mxu0 0.0
    %354 = vmatpush1.xpose.msra.mxu0 0.0
    %355 = vmatprep.subr.mxu0 0.0
    %356 = vmatpush1.xpose.msra.mxu0 0.0
    %357 = vmatprep.subr.mxu0 0.0
    %358 = vmatpush1.xpose.msra.mxu0 0.0
    %359 = vmatprep.subr.mxu0 0.0
    %360 = vmatpush1.xpose.msra.mxu0 0.0
    %361 = vmatprep.mubr.f32.mxu0 0.0
    %362 = vmatmul.mubr.f32.gmra.mrb[0].mxu0 %v293
    %v363 = vpop.f32.mrb[0].mxu0
    %v364 = vadd.f32 0.0, %v363
    %v365 = vpop.f32.mrb[0].mxu0
    %366 = vdwg.mxu0
    %v367 = vsel %vm213, %v286, -inf
    %368 = vmax.xlane.f32.xlu0 %v367
    %v369 = vpop.xlane.xlu0 %368
    %v370 = vsel %vm213, %v364, -inf
    %371 = vmax.xlane.f32.xlu0 %v370
    %v372 = vpop.xlane.xlu0 %371
    %v373 = vsub.f32 %v286, %v369
    %v374 = vsub.f32 %v364, %v372
    %v375 = vmul.f32 %v373, 1.442695
    %v376 = vpow.pop %v375
    %v377 = vmul.f32 %v374, 1.442695
    %v378 = vpow.pop %v377
    %v379 = vsel %vm213, %v376, 0.0
    %380 = vadd.xlane.f32.xlu0 %v379
    %v381 = vpop.xlane.xlu0 %380
    %v382 = vsel %vm213, %v378, 0.0
    %383 = vadd.xlane.f32.xlu0 %v382
    %v384 = vpop.xlane.xlu0 %383
    %v385 = vrcp.pop %v381
    %v386 = vrcp.pop %v384
    %v387 = vmul.f32 %v376, %v385
    %v388 = vmul.f32 %v378, %v386
    %390 = vrot.lane.b32.xlu0 %v208, 64
    %v391 = vpop.permute.xlu0 %390
    %v394 = vsel %vm213, %v387, 0
    %396 = vmatprep.subr.mxu0 0.0
    %397 = vmatpush1.msra.mxu0 %v391
    %398 = vmatprep.subr.mxu0 0.0
    %399 = vmatpush1.msra.mxu0 0.0
    %400 = vmatprep.subr.mxu0 0.0
    %401 = vmatpush1.msra.mxu0 0.0
    %402 = vmatprep.subr.mxu0 0.0
    %403 = vmatpush1.msra.mxu0 0.0
    %404 = vmatprep.subr.mxu0 0.0
    %405 = vmatpush1.msra.mxu0 0.0
    %406 = vmatprep.subr.mxu0 0.0
    %407 = vmatpush1.msra.mxu0 0.0
    %408 = vmatprep.subr.mxu0 0.0
    %409 = vmatpush1.msra.mxu0 0.0
    %410 = vmatprep.subr.mxu0 0.0
    %411 = vmatpush1.msra.mxu0 0.0
    %412 = vmatprep.subr.mxu0 0.0
    %413 = vmatpush1.msra.mxu0 0.0
    %414 = vmatprep.subr.mxu0 0.0
    %415 = vmatpush1.msra.mxu0 0.0
    %416 = vmatprep.subr.mxu0 0.0
    %417 = vmatpush1.msra.mxu0 0.0
    %418 = vmatprep.subr.mxu0 0.0
    %419 = vmatpush1.msra.mxu0 0.0
    %420 = vmatprep.subr.mxu0 0.0
    %421 = vmatpush1.msra.mxu0 0.0
    %422 = vmatprep.subr.mxu0 0.0
    %423 = vmatpush1.msra.mxu0 0.0
    %424 = vmatprep.subr.mxu0 0.0
    %425 = vmatpush1.msra.mxu0 0.0
    %426 = vmatprep.subr.mxu0 0.0
    %427 = vmatpush1.msra.mxu0 0.0
    %428 = vmatprep.subr.mxu0 0.0
    %429 = vmatpush1.msra.mxu0 0.0
    %430 = vmatprep.subr.mxu0 0.0
    %431 = vmatpush1.msra.mxu0 0.0
    %432 = vmatprep.subr.mxu0 0.0
    %433 = vmatpush1.msra.mxu0 0.0
    %434 = vmatprep.subr.mxu0 0.0
    %435 = vmatpush1.msra.mxu0 0.0
    %436 = vmatprep.subr.mxu0 0.0
    %437 = vmatpush1.msra.mxu0 0.0
    %438 = vmatprep.subr.mxu0 0.0
    %439 = vmatpush1.msra.mxu0 0.0
    %440 = vmatprep.subr.mxu0 0.0
    %441 = vmatpush1.msra.mxu0 0.0
    %442 = vmatprep.subr.mxu0 0.0
    %443 = vmatpush1.msra.mxu0 0.0
    %444 = vmatprep.subr.mxu0 0.0
    %445 = vmatpush1.msra.mxu0 0.0
    %446 = vmatprep.subr.mxu0 0.0
    %447 = vmatpush1.msra.mxu0 0.0
    %448 = vmatprep.subr.mxu0 0.0
    %449 = vmatpush1.msra.mxu0 0.0
    %450 = vmatprep.subr.mxu0 0.0
    %451 = vmatpush1.msra.mxu0 0.0
    %452 = vmatprep.subr.mxu0 0.0
    %453 = vmatpush1.msra.mxu0 0.0
    %454 = vmatprep.subr.mxu0 0.0
    %455 = vmatpush1.msra.mxu0 0.0
    %456 = vmatprep.subr.mxu0 0.0
    %457 = vmatpush1.msra.mxu0 0.0
    %458 = vmatprep.subr.mxu0 0.0
    %459 = vmatpush1.msra.mxu0 0.0
    %460 = vmatprep.mubr.f32.mxu0 0.0
    %461 = vmatmul.mubr.f32.gmra.mrb[0].mxu0 %v394
    %v462 = vpop.f32.mrb[0].mxu0
    %v463 = vadd.f32 0.0, %v462
    %v464 = vpop.f32.mrb[0].mxu0
    %465 = vdwg.mxu0
    %467 = vrot.lane.b32.xlu0 %v209, 64
    %v468 = vpop.permute.xlu0 %467
    %v471 = vsel %vm213, %v388, 0
    %473 = vmatprep.subr.mxu0 0.0
    %474 = vmatpush1.msra.mxu0 %v468
    %475 = vmatprep.subr.mxu0 0.0
    %476 = vmatpush1.msra.mxu0 0.0
    %477 = vmatprep.subr.mxu0 0.0
    %478 = vmatpush1.msra.mxu0 0.0
    %479 = vmatprep.subr.mxu0 0.0
    %480 = vmatpush1.msra.mxu0 0.0
    %481 = vmatprep.subr.mxu0 0.0
    %482 = vmatpush1.msra.mxu0 0.0
    %483 = vmatprep.subr.mxu0 0.0
    %484 = vmatpush1.msra.mxu0 0.0
    %485 = vmatprep.subr.mxu0 0.0
    %486 = vmatpush1.msra.mxu0 0.0
    %487 = vmatprep.subr.mxu0 0.0
    %488 = vmatpush1.msra.mxu0 0.0
    %489 = vmatprep.subr.mxu0 0.0
    %490 = vmatpush1.msra.mxu0 0.0
    %491 = vmatprep.subr.mxu0 0.0
    %492 = vmatpush1.msra.mxu0 0.0
    %493 = vmatprep.subr.mxu0 0.0
    %494 = vmatpush1.msra.mxu0 0.0
    %495 = vmatprep.subr.mxu0 0.0
    %496 = vmatpush1.msra.mxu0 0.0
    %497 = vmatprep.subr.mxu0 0.0
    %498 = vmatpush1.msra.mxu0 0.0
    %499 = vmatprep.subr.mxu0 0.0
    %500 = vmatpush1.msra.mxu0 0.0
    %501 = vmatprep.subr.mxu0 0.0
    %502 = vmatpush1.msra.mxu0 0.0
    %503 = vmatprep.subr.mxu0 0.0
    %504 = vmatpush1.msra.mxu0 0.0
    %505 = vmatprep.subr.mxu0 0.0
    %506 = vmatpush1.msra.mxu0 0.0
    %507 = vmatprep.subr.mxu0 0.0
    %508 = vmatpush1.msra.mxu0 0.0
    %509 = vmatprep.subr.mxu0 0.0
    %510 = vmatpush1.msra.mxu0 0.0
    %511 = vmatprep.subr.mxu0 0.0
    %512 = vmatpush1.msra.mxu0 0.0
    %513 = vmatprep.subr.mxu0 0.0
    %514 = vmatpush1.msra.mxu0 0.0
    %515 = vmatprep.subr.mxu0 0.0
    %516 = vmatpush1.msra.mxu0 0.0
    %517 = vmatprep.subr.mxu0 0.0
    %518 = vmatpush1.msra.mxu0 0.0
    %519 = vmatprep.subr.mxu0 0.0
    %520 = vmatpush1.msra.mxu0 0.0
    %521 = vmatprep.subr.mxu0 0.0
    %522 = vmatpush1.msra.mxu0 0.0
    %523 = vmatprep.subr.mxu0 0.0
    %524 = vmatpush1.msra.mxu0 0.0
    %525 = vmatprep.subr.mxu0 0.0
    %526 = vmatpush1.msra.mxu0 0.0
    %527 = vmatprep.subr.mxu0 0.0
    %528 = vmatpush1.msra.mxu0 0.0
    %529 = vmatprep.subr.mxu0 0.0
    %530 = vmatpush1.msra.mxu0 0.0
    %531 = vmatprep.subr.mxu0 0.0
    %532 = vmatpush1.msra.mxu0 0.0
    %533 = vmatprep.subr.mxu0 0.0
    %534 = vmatpush1.msra.mxu0 0.0
    %535 = vmatprep.subr.mxu0 0.0
    %536 = vmatpush1.msra.mxu0 0.0
    %537 = vmatprep.mubr.f32.mxu0 0.0
    %538 = vmatmul.mubr.f32.gmra.mrb[0].mxu0 %v471
    %v539 = vpop.f32.mrb[0].mxu0
    %v540 = vadd.f32 0.0, %v539
    %v541 = vpop.f32.mrb[0].mxu0
    %542 = vdwg.mxu0
    %543 = vrot.lane.b32.xlu0 %v188, 120
    %v544 = vpop.permute.xlu0 %543
    %545 = vrot.lane.b32.xlu0 %v198, 88
    %v546 = vpop.permute.xlu0 %545
    %v547 = vsel %vm213, %v544, 0
    %v549 = vsel %vm213, %v546, 0
    %551 = vmatprep.subr.mxu0 0.0
    %552 = vmatpush1.xpose.msra.mxu0 %v549
    %553 = vmatprep.subr.mxu0 0.0
    %554 = vmatpush1.xpose.msra.mxu0 0.0
    %555 = vmatprep.subr.mxu0 0.0
    %556 = vmatpush1.xpose.msra.mxu0 0.0
    %557 = vmatprep.subr.mxu0 0.0
    %558 = vmatpush1.xpose.msra.mxu0 0.0
    %559 = vmatprep.subr.mxu0 0.0
    %560 = vmatpush1.xpose.msra.mxu0 0.0
    %561 = vmatprep.subr.mxu0 0.0
    %562 = vmatpush1.xpose.msra.mxu0 0.0
    %563 = vmatprep.subr.mxu0 0.0
    %564 = vmatpush1.xpose.msra.mxu0 0.0
    %565 = vmatprep.subr.mxu0 0.0
    %566 = vmatpush1.xpose.msra.mxu0 0.0
    %567 = vmatprep.subr.mxu0 0.0
    %568 = vmatpush1.xpose.msra.mxu0 0.0
    %569 = vmatprep.subr.mxu0 0.0
    %570 = vmatpush1.xpose.msra.mxu0 0.0
    %571 = vmatprep.subr.mxu0 0.0
    %572 = vmatpush1.xpose.msra.mxu0 0.0
    %573 = vmatprep.subr.mxu0 0.0
    %574 = vmatpush1.xpose.msra.mxu0 0.0
    %575 = vmatprep.subr.mxu0 0.0
    %576 = vmatpush1.xpose.msra.mxu0 0.0
    %577 = vmatprep.subr.mxu0 0.0
    %578 = vmatpush1.xpose.msra.mxu0 0.0
    %579 = vmatprep.subr.mxu0 0.0
    %580 = vmatpush1.xpose.msra.mxu0 0.0
    %581 = vmatprep.subr.mxu0 0.0
    %582 = vmatpush1.xpose.msra.mxu0 0.0
    %583 = vmatprep.subr.mxu0 0.0
    %584 = vmatpush1.xpose.msra.mxu0 0.0
    %585 = vmatprep.subr.mxu0 0.0
    %586 = vmatpush1.xpose.msra.mxu0 0.0
    %587 = vmatprep.subr.mxu0 0.0
    %588 = vmatpush1.xpose.msra.mxu0 0.0
    %589 = vmatprep.subr.mxu0 0.0
    %590 = vmatpush1.xpose.msra.mxu0 0.0
    %591 = vmatprep.subr.mxu0 0.0
    %592 = vmatpush1.xpose.msra.mxu0 0.0
    %593 = vmatprep.subr.mxu0 0.0
    %594 = vmatpush1.xpose.msra.mxu0 0.0
    %595 = vmatprep.subr.mxu0 0.0
    %596 = vmatpush1.xpose.msra.mxu0 0.0
    %597 = vmatprep.subr.mxu0 0.0
    %598 = vmatpush1.xpose.msra.mxu0 0.0
    %599 = vmatprep.subr.mxu0 0.0
    %600 = vmatpush1.xpose.msra.mxu0 0.0
    %601 = vmatprep.subr.mxu0 0.0
    %602 = vmatpush1.xpose.msra.mxu0 0.0
    %603 = vmatprep.subr.mxu0 0.0
    %604 = vmatpush1.xpose.msra.mxu0 0.0
    %605 = vmatprep.subr.mxu0 0.0
    %606 = vmatpush1.xpose.msra.mxu0 0.0
    %607 = vmatprep.subr.mxu0 0.0
    %608 = vmatpush1.xpose.msra.mxu0 0.0
    %609 = vmatprep.subr.mxu0 0.0
    %610 = vmatpush1.xpose.msra.mxu0 0.0
    %611 = vmatprep.subr.mxu0 0.0
    %612 = vmatpush1.xpose.msra.mxu0 0.0
    %613 = vmatprep.subr.mxu0 0.0
    %614 = vmatpush1.xpose.msra.mxu0 0.0
    %615 = vmatprep.mubr.f32.mxu0 0.0
    %616 = vmatmul.mubr.f32.gmra.mrb[0].mxu0 %v547
    %v617 = vpop.f32.mrb[0].mxu0
    %v618 = vadd.f32 0.0, %v617
    %v619 = vpop.f32.mrb[0].mxu0
    %620 = vdwg.mxu0
    %621 = vrot.lane.b32.xlu0 %v189, 120
    %v622 = vpop.permute.xlu0 %621
    %623 = vrot.lane.b32.xlu0 %v199, 88
    %v624 = vpop.permute.xlu0 %623
    %v625 = vsel %vm213, %v622, 0
    %v627 = vsel %vm213, %v624, 0
    %629 = vmatprep.subr.mxu0 0.0
    %630 = vmatpush1.xpose.msra.mxu0 %v627
    %631 = vmatprep.subr.mxu0 0.0
    %632 = vmatpush1.xpose.msra.mxu0 0.0
    %633 = vmatprep.subr.mxu0 0.0
    %634 = vmatpush1.xpose.msra.mxu0 0.0
    %635 = vmatprep.subr.mxu0 0.0
    %636 = vmatpush1.xpose.msra.mxu0 0.0
    %637 = vmatprep.subr.mxu0 0.0
    %638 = vmatpush1.xpose.msra.mxu0 0.0
    %639 = vmatprep.subr.mxu0 0.0
    %640 = vmatpush1.xpose.msra.mxu0 0.0
    %641 = vmatprep.subr.mxu0 0.0
    %642 = vmatpush1.xpose.msra.mxu0 0.0
    %643 = vmatprep.subr.mxu0 0.0
    %644 = vmatpush1.xpose.msra.mxu0 0.0
    %645 = vmatprep.subr.mxu0 0.0
    %646 = vmatpush1.xpose.msra.mxu0 0.0
    %647 = vmatprep.subr.mxu0 0.0
    %648 = vmatpush1.xpose.msra.mxu0 0.0
    %649 = vmatprep.subr.mxu0 0.0
    %650 = vmatpush1.xpose.msra.mxu0 0.0
    %651 = vmatprep.subr.mxu0 0.0
    %652 = vmatpush1.xpose.msra.mxu0 0.0
    %653 = vmatprep.subr.mxu0 0.0
    %654 = vmatpush1.xpose.msra.mxu0 0.0
    %655 = vmatprep.subr.mxu0 0.0
    %656 = vmatpush1.xpose.msra.mxu0 0.0
    %657 = vmatprep.subr.mxu0 0.0
    %658 = vmatpush1.xpose.msra.mxu0 0.0
    %659 = vmatprep.subr.mxu0 0.0
    %660 = vmatpush1.xpose.msra.mxu0 0.0
    %661 = vmatprep.subr.mxu0 0.0
    %662 = vmatpush1.xpose.msra.mxu0 0.0
    %663 = vmatprep.subr.mxu0 0.0
    %664 = vmatpush1.xpose.msra.mxu0 0.0
    %665 = vmatprep.subr.mxu0 0.0
    %666 = vmatpush1.xpose.msra.mxu0 0.0
    %667 = vmatprep.subr.mxu0 0.0
    %668 = vmatpush1.xpose.msra.mxu0 0.0
    %669 = vmatprep.subr.mxu0 0.0
    %670 = vmatpush1.xpose.msra.mxu0 0.0
    %671 = vmatprep.subr.mxu0 0.0
    %672 = vmatpush1.xpose.msra.mxu0 0.0
    %673 = vmatprep.subr.mxu0 0.0
    %674 = vmatpush1.xpose.msra.mxu0 0.0
    %675 = vmatprep.subr.mxu0 0.0
    %676 = vmatpush1.xpose.msra.mxu0 0.0
    %677 = vmatprep.subr.mxu0 0.0
    %678 = vmatpush1.xpose.msra.mxu0 0.0
    %679 = vmatprep.subr.mxu0 0.0
    %680 = vmatpush1.xpose.msra.mxu0 0.0
    %681 = vmatprep.subr.mxu0 0.0
    %682 = vmatpush1.xpose.msra.mxu0 0.0
    %683 = vmatprep.subr.mxu0 0.0
    %684 = vmatpush1.xpose.msra.mxu0 0.0
    %685 = vmatprep.subr.mxu0 0.0
    %686 = vmatpush1.xpose.msra.mxu0 0.0
    %687 = vmatprep.subr.mxu0 0.0
    %688 = vmatpush1.xpose.msra.mxu0 0.0
    %689 = vmatprep.subr.mxu0 0.0
    %690 = vmatpush1.xpose.msra.mxu0 0.0
    %691 = vmatprep.subr.mxu0 0.0
    %692 = vmatpush1.xpose.msra.mxu0 0.0
    %693 = vmatprep.mubr.f32.mxu0 0.0
    %694 = vmatmul.mubr.f32.gmra.mrb[0].mxu0 %v625
    %v695 = vpop.f32.mrb[0].mxu0
    %v696 = vadd.f32 0.0, %v695
    %v697 = vpop.f32.mrb[0].mxu0
    %698 = vdwg.mxu0
    %v699 = vsel %vm213, %v618, -inf
    %700 = vmax.xlane.f32.xlu0 %v699
    %v701 = vpop.xlane.xlu0 %700
    %v702 = vsel %vm213, %v696, -inf
    %703 = vmax.xlane.f32.xlu0 %v702
    %v704 = vpop.xlane.xlu0 %703
    %v705 = vsub.f32 %v618, %v701
    %v706 = vsub.f32 %v696, %v704
    %v707 = vmul.f32 %v705, 1.442695
    %v708 = vpow.pop %v707
    %v709 = vmul.f32 %v706, 1.442695
    %v710 = vpow.pop %v709
    %v711 = vsel %vm213, %v708, 0.0
    %712 = vadd.xlane.f32.xlu0 %v711
    %v713 = vpop.xlane.xlu0 %712
    %v714 = vsel %vm213, %v710, 0.0
    %715 = vadd.xlane.f32.xlu0 %v714
    %v716 = vpop.xlane.xlu0 %715
    %v717 = vrcp.pop %v713
    %v718 = vrcp.pop %v716
    %v719 = vmul.f32 %v708, %v717
    %v720 = vmul.f32 %v710, %v718
    %721 = vrot.lane.b32.xlu0 %v208, 56
    %v722 = vpop.permute.xlu0 %721
    %v725 = vsel %vm213, %v719, 0
    %727 = vmatprep.subr.mxu0 0.0
    %728 = vmatpush1.msra.mxu0 %v722
    %729 = vmatprep.subr.mxu0 0.0
    %730 = vmatpush1.msra.mxu0 0.0
    %731 = vmatprep.subr.mxu0 0.0
    %732 = vmatpush1.msra.mxu0 0.0
    %733 = vmatprep.subr.mxu0 0.0
    %734 = vmatpush1.msra.mxu0 0.0
    %735 = vmatprep.subr.mxu0 0.0
    %736 = vmatpush1.msra.mxu0 0.0
    %737 = vmatprep.subr.mxu0 0.0
    %738 = vmatpush1.msra.mxu0 0.0
    %739 = vmatprep.subr.mxu0 0.0
    %740 = vmatpush1.msra.mxu0 0.0
    %741 = vmatprep.subr.mxu0 0.0
    %742 = vmatpush1.msra.mxu0 0.0
    %743 = vmatprep.subr.mxu0 0.0
    %744 = vmatpush1.msra.mxu0 0.0
    %745 = vmatprep.subr.mxu0 0.0
    %746 = vmatpush1.msra.mxu0 0.0
    %747 = vmatprep.subr.mxu0 0.0
    %748 = vmatpush1.msra.mxu0 0.0
    %749 = vmatprep.subr.mxu0 0.0
    %750 = vmatpush1.msra.mxu0 0.0
    %751 = vmatprep.subr.mxu0 0.0
    %752 = vmatpush1.msra.mxu0 0.0
    %753 = vmatprep.subr.mxu0 0.0
    %754 = vmatpush1.msra.mxu0 0.0
    %755 = vmatprep.subr.mxu0 0.0
    %756 = vmatpush1.msra.mxu0 0.0
    %757 = vmatprep.subr.mxu0 0.0
    %758 = vmatpush1.msra.mxu0 0.0
    %759 = vmatprep.subr.mxu0 0.0
    %760 = vmatpush1.msra.mxu0 0.0
    %761 = vmatprep.subr.mxu0 0.0
    %762 = vmatpush1.msra.mxu0 0.0
    %763 = vmatprep.subr.mxu0 0.0
    %764 = vmatpush1.msra.mxu0 0.0
    %765 = vmatprep.subr.mxu0 0.0
    %766 = vmatpush1.msra.mxu0 0.0
    %767 = vmatprep.subr.mxu0 0.0
    %768 = vmatpush1.msra.mxu0 0.0
    %769 = vmatprep.subr.mxu0 0.0
    %770 = vmatpush1.msra.mxu0 0.0
    %771 = vmatprep.subr.mxu0 0.0
    %772 = vmatpush1.msra.mxu0 0.0
    %773 = vmatprep.subr.mxu0 0.0
    %774 = vmatpush1.msra.mxu0 0.0
    %775 = vmatprep.subr.mxu0 0.0
    %776 = vmatpush1.msra.mxu0 0.0
    %777 = vmatprep.subr.mxu0 0.0
    %778 = vmatpush1.msra.mxu0 0.0
    %779 = vmatprep.subr.mxu0 0.0
    %780 = vmatpush1.msra.mxu0 0.0
    %781 = vmatprep.subr.mxu0 0.0
    %782 = vmatpush1.msra.mxu0 0.0
    %783 = vmatprep.subr.mxu0 0.0
    %784 = vmatpush1.msra.mxu0 0.0
    %785 = vmatprep.subr.mxu0 0.0
    %786 = vmatpush1.msra.mxu0 0.0
    %787 = vmatprep.subr.mxu0 0.0
    %788 = vmatpush1.msra.mxu0 0.0
    %789 = vmatprep.subr.mxu0 0.0
    %790 = vmatpush1.msra.mxu0 0.0
    %791 = vmatprep.mubr.f32.mxu0 0.0
    %792 = vmatmul.mubr.f32.gmra.mrb[0].mxu0 %v725
    %v793 = vpop.f32.mrb[0].mxu0
    %v794 = vadd.f32 0.0, %v793
    %v795 = vpop.f32.mrb[0].mxu0
    %796 = vdwg.mxu0
    %797 = vrot.lane.b32.xlu0 %v209, 56
    %v798 = vpop.permute.xlu0 %797
    %v801 = vsel %vm213, %v720, 0
    %803 = vmatprep.subr.mxu0 0.0
    %804 = vmatpush1.msra.mxu0 %v798
    %805 = vmatprep.subr.mxu0 0.0
    %806 = vmatpush1.msra.mxu0 0.0
    %807 = vmatprep.subr.mxu0 0.0
    %808 = vmatpush1.msra.mxu0 0.0
    %809 = vmatprep.subr.mxu0 0.0
    %810 = vmatpush1.msra.mxu0 0.0
    %811 = vmatprep.subr.mxu0 0.0
    %812 = vmatpush1.msra.mxu0 0.0
    %813 = vmatprep.subr.mxu0 0.0
    %814 = vmatpush1.msra.mxu0 0.0
    %815 = vmatprep.subr.mxu0 0.0
    %816 = vmatpush1.msra.mxu0 0.0
    %817 = vmatprep.subr.mxu0 0.0
    %818 = vmatpush1.msra.mxu0 0.0
    %819 = vmatprep.subr.mxu0 0.0
    %820 = vmatpush1.msra.mxu0 0.0
    %821 = vmatprep.subr.mxu0 0.0
    %822 = vmatpush1.msra.mxu0 0.0
    %823 = vmatprep.subr.mxu0 0.0
    %824 = vmatpush1.msra.mxu0 0.0
    %825 = vmatprep.subr.mxu0 0.0
    %826 = vmatpush1.msra.mxu0 0.0
    %827 = vmatprep.subr.mxu0 0.0
    %828 = vmatpush1.msra.mxu0 0.0
    %829 = vmatprep.subr.mxu0 0.0
    %830 = vmatpush1.msra.mxu0 0.0
    %831 = vmatprep.subr.mxu0 0.0
    %832 = vmatpush1.msra.mxu0 0.0
    %833 = vmatprep.subr.mxu0 0.0
    %834 = vmatpush1.msra.mxu0 0.0
    %835 = vmatprep.subr.mxu0 0.0
    %836 = vmatpush1.msra.mxu0 0.0
    %837 = vmatprep.subr.mxu0 0.0
    %838 = vmatpush1.msra.mxu0 0.0
    %839 = vmatprep.subr.mxu0 0.0
    %840 = vmatpush1.msra.mxu0 0.0
    %841 = vmatprep.subr.mxu0 0.0
    %842 = vmatpush1.msra.mxu0 0.0
    %843 = vmatprep.subr.mxu0 0.0
    %844 = vmatpush1.msra.mxu0 0.0
    %845 = vmatprep.subr.mxu0 0.0
    %846 = vmatpush1.msra.mxu0 0.0
    %847 = vmatprep.subr.mxu0 0.0
    %848 = vmatpush1.msra.mxu0 0.0
    %849 = vmatprep.subr.mxu0 0.0
    %850 = vmatpush1.msra.mxu0 0.0
    %851 = vmatprep.subr.mxu0 0.0
    %852 = vmatpush1.msra.mxu0 0.0
    %853 = vmatprep.subr.mxu0 0.0
    %854 = vmatpush1.msra.mxu0 0.0
    %855 = vmatprep.subr.mxu0 0.0
    %856 = vmatpush1.msra.mxu0 0.0
    %857 = vmatprep.subr.mxu0 0.0
    %858 = vmatpush1.msra.mxu0 0.0
    %859 = vmatprep.subr.mxu0 0.0
    %860 = vmatpush1.msra.mxu0 0.0
    %861 = vmatprep.subr.mxu0 0.0
    %862 = vmatpush1.msra.mxu0 0.0
    %863 = vmatprep.subr.mxu0 0.0
    %864 = vmatpush1.msra.mxu0 0.0
    %865 = vmatprep.subr.mxu0 0.0
    %866 = vmatpush1.msra.mxu0 0.0
    %867 = vmatprep.mubr.f32.mxu0 0.0
    %868 = vmatmul.mubr.f32.gmra.mrb[0].mxu0 %v801
    %v869 = vpop.f32.mrb[0].mxu0
    %v870 = vadd.f32 0.0, %v869
    %v871 = vpop.f32.mrb[0].mxu0
    %872 = vdwg.mxu0
    %873 = vrot.lane.b32.xlu0 %v188, 112
    %v874 = vpop.permute.xlu0 %873
    %875 = vrot.lane.b32.xlu0 %v198, 80
    %v876 = vpop.permute.xlu0 %875
    %v877 = vsel %vm213, %v874, 0
    %v879 = vsel %vm213, %v876, 0
    %881 = vmatprep.subr.mxu0 0.0
    %882 = vmatpush1.xpose.msra.mxu0 %v879
    %883 = vmatprep.subr.mxu0 0.0
    %884 = vmatpush1.xpose.msra.mxu0 0.0
    %885 = vmatprep.subr.mxu0 0.0
    %886 = vmatpush1.xpose.msra.mxu0 0.0
    %887 = vmatprep.subr.mxu0 0.0
    %888 = vmatpush1.xpose.msra.mxu0 0.0
    %889 = vmatprep.subr.mxu0 0.0
    %890 = vmatpush1.xpose.msra.mxu0 0.0
    %891 = vmatprep.subr.mxu0 0.0
    %892 = vmatpush1.xpose.msra.mxu0 0.0
    %893 = vmatprep.subr.mxu0 0.0
    %894 = vmatpush1.xpose.msra.mxu0 0.0
    %895 = vmatprep.subr.mxu0 0.0
    %896 = vmatpush1.xpose.msra.mxu0 0.0
    %897 = vmatprep.subr.mxu0 0.0
    %898 = vmatpush1.xpose.msra.mxu0 0.0
    %899 = vmatprep.subr.mxu0 0.0
    %900 = vmatpush1.xpose.msra.mxu0 0.0
    %901 = vmatprep.subr.mxu0 0.0
    %902 = vmatpush1.xpose.msra.mxu0 0.0
    %903 = vmatprep.subr.mxu0 0.0
    %904 = vmatpush1.xpose.msra.mxu0 0.0
    %905 = vmatprep.subr.mxu0 0.0
    %906 = vmatpush1.xpose.msra.mxu0 0.0
    %907 = vmatprep.subr.mxu0 0.0
    %908 = vmatpush1.xpose.msra.mxu0 0.0
    %909 = vmatprep.subr.mxu0 0.0
    %910 = vmatpush1.xpose.msra.mxu0 0.0
    %911 = vmatprep.subr.mxu0 0.0
    %912 = vmatpush1.xpose.msra.mxu0 0.0
    %913 = vmatprep.subr.mxu0 0.0
    %914 = vmatpush1.xpose.msra.mxu0 0.0
    %915 = vmatprep.subr.mxu0 0.0
    %916 = vmatpush1.xpose.msra.mxu0 0.0
    %917 = vmatprep.subr.mxu0 0.0
    %918 = vmatpush1.xpose.msra.mxu0 0.0
    %919 = vmatprep.subr.mxu0 0.0
    %920 = vmatpush1.xpose.msra.mxu0 0.0
    %921 = vmatprep.subr.mxu0 0.0
    %922 = vmatpush1.xpose.msra.mxu0 0.0
    %923 = vmatprep.subr.mxu0 0.0
    %924 = vmatpush1.xpose.msra.mxu0 0.0
    %925 = vmatprep.subr.mxu0 0.0
    %926 = vmatpush1.xpose.msra.mxu0 0.0
    %927 = vmatprep.subr.mxu0 0.0
    %928 = vmatpush1.xpose.msra.mxu0 0.0
    %929 = vmatprep.subr.mxu0 0.0
    %930 = vmatpush1.xpose.msra.mxu0 0.0
    %931 = vmatprep.subr.mxu0 0.0
    %932 = vmatpush1.xpose.msra.mxu0 0.0
    %933 = vmatprep.subr.mxu0 0.0
    %934 = vmatpush1.xpose.msra.mxu0 0.0
    %935 = vmatprep.subr.mxu0 0.0
    %936 = vmatpush1.xpose.msra.mxu0 0.0
    %937 = vmatprep.subr.mxu0 0.0
    %938 = vmatpush1.xpose.msra.mxu0 0.0
    %939 = vmatprep.subr.mxu0 0.0
    %940 = vmatpush1.xpose.msra.mxu0 0.0
    %941 = vmatprep.subr.mxu0 0.0
    %942 = vmatpush1.xpose.msra.mxu0 0.0
    %943 = vmatprep.subr.mxu0 0.0
    %944 = vmatpush1.xpose.msra.mxu0 0.0
    %945 = vmatprep.mubr.f32.mxu0 0.0
    %946 = vmatmul.mubr.f32.gmra.mrb[0].mxu0 %v877
    %v947 = vpop.f32.mrb[0].mxu0
    %v948 = vadd.f32 0.0, %v947
    %v949 = vpop.f32.mrb[0].mxu0
    %950 = vdwg.mxu0
    %951 = vrot.lane.b32.xlu0 %v189, 112
    %v952 = vpop.permute.xlu0 %951
    %953 = vrot.lane.b32.xlu0 %v199, 80
    %v954 = vpop.permute.xlu0 %953
    %v955 = vsel %vm213, %v952, 0
    %v957 = vsel %vm213, %v954, 0
    %959 = vmatprep.subr.mxu0 0.0
    %960 = vmatpush1.xpose.msra.mxu0 %v957
    %961 = vmatprep.subr.mxu0 0.0
    %962 = vmatpush1.xpose.msra.mxu0 0.0
    %963 = vmatprep.subr.mxu0 0.0
    %964 = vmatpush1.xpose.msra.mxu0 0.0
    %965 = vmatprep.subr.mxu0 0.0
    %966 = vmatpush1.xpose.msra.mxu0 0.0
    %967 = vmatprep.subr.mxu0 0.0
    %968 = vmatpush1.xpose.msra.mxu0 0.0
    %969 = vmatprep.subr.mxu0 0.0
    %970 = vmatpush1.xpose.msra.mxu0 0.0
    %971 = vmatprep.subr.mxu0 0.0
    %972 = vmatpush1.xpose.msra.mxu0 0.0
    %973 = vmatprep.subr.mxu0 0.0
    %974 = vmatpush1.xpose.msra.mxu0 0.0
    %975 = vmatprep.subr.mxu0 0.0
    %976 = vmatpush1.xpose.msra.mxu0 0.0
    %977 = vmatprep.subr.mxu0 0.0
    %978 = vmatpush1.xpose.msra.mxu0 0.0
    %979 = vmatprep.subr.mxu0 0.0
    %980 = vmatpush1.xpose.msra.mxu0 0.0
    %981 = vmatprep.subr.mxu0 0.0
    %982 = vmatpush1.xpose.msra.mxu0 0.0
    %983 = vmatprep.subr.mxu0 0.0
    %984 = vmatpush1.xpose.msra.mxu0 0.0
    %985 = vmatprep.subr.mxu0 0.0
    %986 = vmatpush1.xpose.msra.mxu0 0.0
    %987 = vmatprep.subr.mxu0 0.0
    %988 = vmatpush1.xpose.msra.mxu0 0.0
    %989 = vmatprep.subr.mxu0 0.0
    %990 = vmatpush1.xpose.msra.mxu0 0.0
    %991 = vmatprep.subr.mxu0 0.0
    %992 = vmatpush1.xpose.msra.mxu0 0.0
    %993 = vmatprep.subr.mxu0 0.0
    %994 = vmatpush1.xpose.msra.mxu0 0.0
    %995 = vmatprep.subr.mxu0 0.0
    %996 = vmatpush1.xpose.msra.mxu0 0.0
    %997 = vmatprep.subr.mxu0 0.0
    %998 = vmatpush1.xpose.msra.mxu0 0.0
    %999 = vmatprep.subr.mxu0 0.0
    %1000 = vmatpush1.xpose.msra.mxu0 0.0
    %1001 = vmatprep.subr.mxu0 0.0
    %1002 = vmatpush1.xpose.msra.mxu0 0.0
    %1003 = vmatprep.subr.mxu0 0.0
    %1004 = vmatpush1.xpose.msra.mxu0 0.0
    %1005 = vmatprep.subr.mxu0 0.0
    %1006 = vmatpush1.xpose.msra.mxu0 0.0
    %1007 = vmatprep.subr.mxu0 0.0
    %1008 = vmatpush1.xpose.msra.mxu0 0.0
    %1009 = vmatprep.subr.mxu0 0.0
    %1010 = vmatpush1.xpose.msra.mxu0 0.0
    %1011 = vmatprep.subr.mxu0 0.0
    %1012 = vmatpush1.xpose.msra.mxu0 0.0
    %1013 = vmatprep.subr.mxu0 0.0
    %1014 = vmatpush1.xpose.msra.mxu0 0.0
    %1015 = vmatprep.subr.mxu0 0.0
    %1016 = vmatpush1.xpose.msra.mxu0 0.0
    %1017 = vmatprep.subr.mxu0 0.0
    %1018 = vmatpush1.xpose.msra.mxu0 0.0
    %1019 = vmatprep.subr.mxu0 0.0
    %1020 = vmatpush1.xpose.msra.mxu0 0.0
    %1021 = vmatprep.subr.mxu0 0.0
    %1022 = vmatpush1.xpose.msra.mxu0 0.0
    %1023 = vmatprep.mubr.f32.mxu0 0.0
    %1024 = vmatmul.mubr.f32.gmra.mrb[0].mxu0 %v955
    %v1025 = vpop.f32.mrb[0].mxu0
    %v1026 = vadd.f32 0.0, %v1025
    %v1027 = vpop.f32.mrb[0].mxu0
    %1028 = vdwg.mxu0
    %v1029 = vsel %vm213, %v948, -inf
    %1030 = vmax.xlane.f32.xlu0 %v1029
    %v1031 = vpop.xlane.xlu0 %1030
    %v1032 = vsel %vm213, %v1026, -inf
    %1033 = vmax.xlane.f32.xlu0 %v1032
    %v1034 = vpop.xlane.xlu0 %1033
    %v1035 = vsub.f32 %v948, %v1031
    %v1036 = vsub.f32 %v1026, %v1034
    %v1037 = vmul.f32 %v1035, 1.442695
    %v1038 = vpow.pop %v1037
    %v1039 = vmul.f32 %v1036, 1.442695
    %v1040 = vpow.pop %v1039
    %v1041 = vsel %vm213, %v1038, 0.0
    %1042 = vadd.xlane.f32.xlu0 %v1041
    %v1043 = vpop.xlane.xlu0 %1042
    %v1044 = vsel %vm213, %v1040, 0.0
    %1045 = vadd.xlane.f32.xlu0 %v1044
    %v1046 = vpop.xlane.xlu0 %1045
    %v1047 = vrcp.pop %v1043
    %v1048 = vrcp.pop %v1046
    %v1049 = vmul.f32 %v1038, %v1047
    %v1050 = vmul.f32 %v1040, %v1048
    %1051 = vrot.lane.b32.xlu0 %v208, 48
    %v1052 = vpop.permute.xlu0 %1051
    %v1055 = vsel %vm213, %v1049, 0
    %1057 = vmatprep.subr.mxu0 0.0
    %1058 = vmatpush1.msra.mxu0 %v1052
    %1059 = vmatprep.subr.mxu0 0.0
    %1060 = vmatpush1.msra.mxu0 0.0
    %1061 = vmatprep.subr.mxu0 0.0
    %1062 = vmatpush1.msra.mxu0 0.0
    %1063 = vmatprep.subr.mxu0 0.0
    %1064 = vmatpush1.msra.mxu0 0.0
    %1065 = vmatprep.subr.mxu0 0.0
    %1066 = vmatpush1.msra.mxu0 0.0
    %1067 = vmatprep.subr.mxu0 0.0
    %1068 = vmatpush1.msra.mxu0 0.0
    %1069 = vmatprep.subr.mxu0 0.0
    %1070 = vmatpush1.msra.mxu0 0.0
    %1071 = vmatprep.subr.mxu0 0.0
    %1072 = vmatpush1.msra.mxu0 0.0
    %1073 = vmatprep.subr.mxu0 0.0
    %1074 = vmatpush1.msra.mxu0 0.0
    %1075 = vmatprep.subr.mxu0 0.0
    %1076 = vmatpush1.msra.mxu0 0.0
    %1077 = vmatprep.subr.mxu0 0.0
    %1078 = vmatpush1.msra.mxu0 0.0
    %1079 = vmatprep.subr.mxu0 0.0
    %1080 = vmatpush1.msra.mxu0 0.0
    %1081 = vmatprep.subr.mxu0 0.0
    %1082 = vmatpush1.msra.mxu0 0.0
    %1083 = vmatprep.subr.mxu0 0.0
    %1084 = vmatpush1.msra.mxu0 0.0
    %1085 = vmatprep.subr.mxu0 0.0
    %1086 = vmatpush1.msra.mxu0 0.0
    %1087 = vmatprep.subr.mxu0 0.0
    %1088 = vmatpush1.msra.mxu0 0.0
    %1089 = vmatprep.subr.mxu0 0.0
    %1090 = vmatpush1.msra.mxu0 0.0
    %1091 = vmatprep.subr.mxu0 0.0
    %1092 = vmatpush1.msra.mxu0 0.0
    %1093 = vmatprep.subr.mxu0 0.0
    %1094 = vmatpush1.msra.mxu0 0.0
    %1095 = vmatprep.subr.mxu0 0.0
    %1096 = vmatpush1.msra.mxu0 0.0
    %1097 = vmatprep.subr.mxu0 0.0
    %1098 = vmatpush1.msra.mxu0 0.0
    %1099 = vmatprep.subr.mxu0 0.0
    %1100 = vmatpush1.msra.mxu0 0.0
    %1101 = vmatprep.subr.mxu0 0.0
    %1102 = vmatpush1.msra.mxu0 0.0
    %1103 = vmatprep.subr.mxu0 0.0
    %1104 = vmatpush1.msra.mxu0 0.0
    %1105 = vmatprep.subr.mxu0 0.0
    %1106 = vmatpush1.msra.mxu0 0.0
    %1107 = vmatprep.subr.mxu0 0.0
    %1108 = vmatpush1.msra.mxu0 0.0
    %1109 = vmatprep.subr.mxu0 0.0
    %1110 = vmatpush1.msra.mxu0 0.0
    %1111 = vmatprep.subr.mxu0 0.0
    %1112 = vmatpush1.msra.mxu0 0.0
    %1113 = vmatprep.subr.mxu0 0.0
    %1114 = vmatpush1.msra.mxu0 0.0
    %1115 = vmatprep.subr.mxu0 0.0
    %1116 = vmatpush1.msra.mxu0 0.0
    %1117 = vmatprep.subr.mxu0 0.0
    %1118 = vmatpush1.msra.mxu0 0.0
    %1119 = vmatprep.subr.mxu0 0.0
    %1120 = vmatpush1.msra.mxu0 0.0
    %1121 = vmatprep.mubr.f32.mxu0 0.0
    %1122 = vmatmul.mubr.f32.gmra.mrb[0].mxu0 %v1055
    %v1123 = vpop.f32.mrb[0].mxu0
    %v1124 = vadd.f32 0.0, %v1123
    %v1125 = vpop.f32.mrb[0].mxu0
    %1126 = vdwg.mxu0
    %1127 = vrot.lane.b32.xlu0 %v209, 48
    %v1128 = vpop.permute.xlu0 %1127
    %v1131 = vsel %vm213, %v1050, 0
    %1133 = vmatprep.subr.mxu0 0.0
    %1134 = vmatpush1.msra.mxu0 %v1128
    %1135 = vmatprep.subr.mxu0 0.0
    %1136 = vmatpush1.msra.mxu0 0.0
    %1137 = vmatprep.subr.mxu0 0.0
    %1138 = vmatpush1.msra.mxu0 0.0
    %1139 = vmatprep.subr.mxu0 0.0
    %1140 = vmatpush1.msra.mxu0 0.0
    %1141 = vmatprep.subr.mxu0 0.0
    %1142 = vmatpush1.msra.mxu0 0.0
    %1143 = vmatprep.subr.mxu0 0.0
    %1144 = vmatpush1.msra.mxu0 0.0
    %1145 = vmatprep.subr.mxu0 0.0
    %1146 = vmatpush1.msra.mxu0 0.0
    %1147 = vmatprep.subr.mxu0 0.0
    %1148 = vmatpush1.msra.mxu0 0.0
    %1149 = vmatprep.subr.mxu0 0.0
    %1150 = vmatpush1.msra.mxu0 0.0
    %1151 = vmatprep.subr.mxu0 0.0
    %1152 = vmatpush1.msra.mxu0 0.0
    %1153 = vmatprep.subr.mxu0 0.0
    %1154 = vmatpush1.msra.mxu0 0.0
    %1155 = vmatprep.subr.mxu0 0.0
    %1156 = vmatpush1.msra.mxu0 0.0
    %1157 = vmatprep.subr.mxu0 0.0
    %1158 = vmatpush1.msra.mxu0 0.0
    %1159 = vmatprep.subr.mxu0 0.0
    %1160 = vmatpush1.msra.mxu0 0.0
    %1161 = vmatprep.subr.mxu0 0.0
    %1162 = vmatpush1.msra.mxu0 0.0
    %1163 = vmatprep.subr.mxu0 0.0
    %1164 = vmatpush1.msra.mxu0 0.0
    %1165 = vmatprep.subr.mxu0 0.0
    %1166 = vmatpush1.msra.mxu0 0.0
    %1167 = vmatprep.subr.mxu0 0.0
    %1168 = vmatpush1.msra.mxu0 0.0
    %1169 = vmatprep.subr.mxu0 0.0
    %1170 = vmatpush1.msra.mxu0 0.0
    %1171 = vmatprep.subr.mxu0 0.0
    %1172 = vmatpush1.msra.mxu0 0.0
    %1173 = vmatprep.subr.mxu0 0.0
    %1174 = vmatpush1.msra.mxu0 0.0
    %1175 = vmatprep.subr.mxu0 0.0
    %1176 = vmatpush1.msra.mxu0 0.0
    %1177 = vmatprep.subr.mxu0 0.0
    %1178 = vmatpush1.msra.mxu0 0.0
    %1179 = vmatprep.subr.mxu0 0.0
    %1180 = vmatpush1.msra.mxu0 0.0
    %1181 = vmatprep.subr.mxu0 0.0
    %1182 = vmatpush1.msra.mxu0 0.0
    %1183 = vmatprep.subr.mxu0 0.0
    %1184 = vmatpush1.msra.mxu0 0.0
    %1185 = vmatprep.subr.mxu0 0.0
    %1186 = vmatpush1.msra.mxu0 0.0
    %1187 = vmatprep.subr.mxu0 0.0
    %1188 = vmatpush1.msra.mxu0 0.0
    %1189 = vmatprep.subr.mxu0 0.0
    %1190 = vmatpush1.msra.mxu0 0.0
    %1191 = vmatprep.subr.mxu0 0.0
    %1192 = vmatpush1.msra.mxu0 0.0
    %1193 = vmatprep.subr.mxu0 0.0
    %1194 = vmatpush1.msra.mxu0 0.0
    %1195 = vmatprep.subr.mxu0 0.0
    %1196 = vmatpush1.msra.mxu0 0.0
    %1197 = vmatprep.mubr.f32.mxu0 0.0
    %1198 = vmatmul.mubr.f32.gmra.mrb[0].mxu0 %v1131
    %v1199 = vpop.f32.mrb[0].mxu0
    %v1200 = vadd.f32 0.0, %v1199
    %v1201 = vpop.f32.mrb[0].mxu0
    %1202 = vdwg.mxu0
    %1203 = vrot.lane.b32.xlu0 %v188, 104
    %v1204 = vpop.permute.xlu0 %1203
    %1205 = vrot.lane.b32.xlu0 %v198, 72
    %v1206 = vpop.permute.xlu0 %1205
    %v1207 = vsel %vm213, %v1204, 0
    %v1209 = vsel %vm213, %v1206, 0
    %1211 = vmatprep.subr.mxu0 0.0
    %1212 = vmatpush1.xpose.msra.mxu0 %v1209
    %1213 = vmatprep.subr.mxu0 0.0
    %1214 = vmatpush1.xpose.msra.mxu0 0.0
    %1215 = vmatprep.subr.mxu0 0.0
    %1216 = vmatpush1.xpose.msra.mxu0 0.0
    %1217 = vmatprep.subr.mxu0 0.0
    %1218 = vmatpush1.xpose.msra.mxu0 0.0
    %1219 = vmatprep.subr.mxu0 0.0
    %1220 = vmatpush1.xpose.msra.mxu0 0.0
    %1221 = vmatprep.subr.mxu0 0.0
    %1222 = vmatpush1.xpose.msra.mxu0 0.0
    %1223 = vmatprep.subr.mxu0 0.0
    %1224 = vmatpush1.xpose.msra.mxu0 0.0
    %1225 = vmatprep.subr.mxu0 0.0
    %1226 = vmatpush1.xpose.msra.mxu0 0.0
    %1227 = vmatprep.subr.mxu0 0.0
    %1228 = vmatpush1.xpose.msra.mxu0 0.0
    %1229 = vmatprep.subr.mxu0 0.0
    %1230 = vmatpush1.xpose.msra.mxu0 0.0
    %1231 = vmatprep.subr.mxu0 0.0
    %1232 = vmatpush1.xpose.msra.mxu0 0.0
    %1233 = vmatprep.subr.mxu0 0.0
    %1234 = vmatpush1.xpose.msra.mxu0 0.0
    %1235 = vmatprep.subr.mxu0 0.0
    %1236 = vmatpush1.xpose.msra.mxu0 0.0
    %1237 = vmatprep.subr.mxu0 0.0
    %1238 = vmatpush1.xpose.msra.mxu0 0.0
    %1239 = vmatprep.subr.mxu0 0.0
    %1240 = vmatpush1.xpose.msra.mxu0 0.0
    %1241 = vmatprep.subr.mxu0 0.0
    %1242 = vmatpush1.xpose.msra.mxu0 0.0
    %1243 = vmatprep.subr.mxu0 0.0
    %1244 = vmatpush1.xpose.msra.mxu0 0.0
    %1245 = vmatprep.subr.mxu0 0.0
    %1246 = vmatpush1.xpose.msra.mxu0 0.0
    %1247 = vmatprep.subr.mxu0 0.0
    %1248 = vmatpush1.xpose.msra.mxu0 0.0
    %1249 = vmatprep.subr.mxu0 0.0
    %1250 = vmatpush1.xpose.msra.mxu0 0.0
    %1251 = vmatprep.subr.mxu0 0.0
    %1252 = vmatpush1.xpose.msra.mxu0 0.0
    %1253 = vmatprep.subr.mxu0 0.0
    %1254 = vmatpush1.xpose.msra.mxu0 0.0
    %1255 = vmatprep.subr.mxu0 0.0
    %1256 = vmatpush1.xpose.msra.mxu0 0.0
    %1257 = vmatprep.subr.mxu0 0.0
    %1258 = vmatpush1.xpose.msra.mxu0 0.0
    %1259 = vmatprep.subr.mxu0 0.0
    %1260 = vmatpush1.xpose.msra.mxu0 0.0
    %1261 = vmatprep.subr.mxu0 0.0
    %1262 = vmatpush1.xpose.msra.mxu0 0.0
    %1263 = vmatprep.subr.mxu0 0.0
    %1264 = vmatpush1.xpose.msra.mxu0 0.0
    %1265 = vmatprep.subr.mxu0 0.0
    %1266 = vmatpush1.xpose.msra.mxu0 0.0
    %1267 = vmatprep.subr.mxu0 0.0
    %1268 = vmatpush1.xpose.msra.mxu0 0.0
    %1269 = vmatprep.subr.mxu0 0.0
    %1270 = vmatpush1.xpose.msra.mxu0 0.0
    %1271 = vmatprep.subr.mxu0 0.0
    %1272 = vmatpush1.xpose.msra.mxu0 0.0
    %1273 = vmatprep.subr.mxu0 0.0
    %1274 = vmatpush1.xpose.msra.mxu0 0.0
    %1275 = vmatprep.mubr.f32.mxu0 0.0
    %1276 = vmatmul.mubr.f32.gmra.mrb[0].mxu0 %v1207
    %v1277 = vpop.f32.mrb[0].mxu0
    %v1278 = vadd.f32 0.0, %v1277
    %v1279 = vpop.f32.mrb[0].mxu0
    %1280 = vdwg.mxu0
    %1281 = vrot.lane.b32.xlu0 %v189, 104
    %v1282 = vpop.permute.xlu0 %1281
    %1283 = vrot.lane.b32.xlu0 %v199, 72
    %v1284 = vpop.permute.xlu0 %1283
    %v1285 = vsel %vm213, %v1282, 0
    %v1287 = vsel %vm213, %v1284, 0
    %1289 = vmatprep.subr.mxu0 0.0
    %1290 = vmatpush1.xpose.msra.mxu0 %v1287
    %1291 = vmatprep.subr.mxu0 0.0
    %1292 = vmatpush1.xpose.msra.mxu0 0.0
    %1293 = vmatprep.subr.mxu0 0.0
    %1294 = vmatpush1.xpose.msra.mxu0 0.0
    %1295 = vmatprep.subr.mxu0 0.0
    %1296 = vmatpush1.xpose.msra.mxu0 0.0
    %1297 = vmatprep.subr.mxu0 0.0
    %1298 = vmatpush1.xpose.msra.mxu0 0.0
    %1299 = vmatprep.subr.mxu0 0.0
    %1300 = vmatpush1.xpose.msra.mxu0 0.0
    %1301 = vmatprep.subr.mxu0 0.0
    %1302 = vmatpush1.xpose.msra.mxu0 0.0
    %1303 = vmatprep.subr.mxu0 0.0
    %1304 = vmatpush1.xpose.msra.mxu0 0.0
    %1305 = vmatprep.subr.mxu0 0.0
    %1306 = vmatpush1.xpose.msra.mxu0 0.0
    %1307 = vmatprep.subr.mxu0 0.0
    %1308 = vmatpush1.xpose.msra.mxu0 0.0
    %1309 = vmatprep.subr.mxu0 0.0
    %1310 = vmatpush1.xpose.msra.mxu0 0.0
    %1311 = vmatprep.subr.mxu0 0.0
    %1312 = vmatpush1.xpose.msra.mxu0 0.0
    %1313 = vmatprep.subr.mxu0 0.0
    %1314 = vmatpush1.xpose.msra.mxu0 0.0
    %1315 = vmatprep.subr.mxu0 0.0
    %1316 = vmatpush1.xpose.msra.mxu0 0.0
    %1317 = vmatprep.subr.mxu0 0.0
    %1318 = vmatpush1.xpose.msra.mxu0 0.0
    %1319 = vmatprep.subr.mxu0 0.0
    %1320 = vmatpush1.xpose.msra.mxu0 0.0
    %1321 = vmatprep.subr.mxu0 0.0
    %1322 = vmatpush1.xpose.msra.mxu0 0.0
    %1323 = vmatprep.subr.mxu0 0.0
    %1324 = vmatpush1.xpose.msra.mxu0 0.0
    %1325 = vmatprep.subr.mxu0 0.0
    %1326 = vmatpush1.xpose.msra.mxu0 0.0
    %1327 = vmatprep.subr.mxu0 0.0
    %1328 = vmatpush1.xpose.msra.mxu0 0.0
    %1329 = vmatprep.subr.mxu0 0.0
    %1330 = vmatpush1.xpose.msra.mxu0 0.0
    %1331 = vmatprep.subr.mxu0 0.0
    %1332 = vmatpush1.xpose.msra.mxu0 0.0
    %1333 = vmatprep.subr.mxu0 0.0
    %1334 = vmatpush1.xpose.msra.mxu0 0.0
    %1335 = vmatprep.subr.mxu0 0.0
    %1336 = vmatpush1.xpose.msra.mxu0 0.0
    %1337 = vmatprep.subr.mxu0 0.0
    %1338 = vmatpush1.xpose.msra.mxu0 0.0
    %1339 = vmatprep.subr.mxu0 0.0
    %1340 = vmatpush1.xpose.msra.mxu0 0.0
    %1341 = vmatprep.subr.mxu0 0.0
    %1342 = vmatpush1.xpose.msra.mxu0 0.0
    %1343 = vmatprep.subr.mxu0 0.0
    %1344 = vmatpush1.xpose.msra.mxu0 0.0
    %1345 = vmatprep.subr.mxu0 0.0
    %1346 = vmatpush1.xpose.msra.mxu0 0.0
    %1347 = vmatprep.subr.mxu0 0.0
    %1348 = vmatpush1.xpose.msra.mxu0 0.0
    %1349 = vmatprep.subr.mxu0 0.0
    %1350 = vmatpush1.xpose.msra.mxu0 0.0
    %1351 = vmatprep.subr.mxu0 0.0
    %1352 = vmatpush1.xpose.msra.mxu0 0.0
    %1353 = vmatprep.mubr.f32.mxu0 0.0
    %1354 = vmatmul.mubr.f32.gmra.mrb[0].mxu0 %v1285
    %v1355 = vpop.f32.mrb[0].mxu0
    %v1356 = vadd.f32 0.0, %v1355
    %v1357 = vpop.f32.mrb[0].mxu0
    %1358 = vdwg.mxu0
    %v1359 = vsel %vm213, %v1278, -inf
    %1360 = vmax.xlane.f32.xlu0 %v1359
    %v1361 = vpop.xlane.xlu0 %1360
    %v1362 = vsel %vm213, %v1356, -inf
    %1363 = vmax.xlane.f32.xlu0 %v1362
    %v1364 = vpop.xlane.xlu0 %1363
    %v1365 = vsub.f32 %v1278, %v1361
    %v1366 = vsub.f32 %v1356, %v1364
    %v1367 = vmul.f32 %v1365, 1.442695
    %v1368 = vpow.pop %v1367
    %v1369 = vmul.f32 %v1366, 1.442695
    %v1370 = vpow.pop %v1369
    %v1371 = vsel %vm213, %v1368, 0.0
    %1372 = vadd.xlane.f32.xlu0 %v1371
    %v1373 = vpop.xlane.xlu0 %1372
    %v1374 = vsel %vm213, %v1370, 0.0
    %1375 = vadd.xlane.f32.xlu0 %v1374
    %v1376 = vpop.xlane.xlu0 %1375
    %v1377 = vrcp.pop %v1373
    %v1378 = vrcp.pop %v1376
    %v1379 = vmul.f32 %v1368, %v1377
    %v1380 = vmul.f32 %v1370, %v1378
    %1381 = vrot.lane.b32.xlu0 %v208, 40
    %v1382 = vpop.permute.xlu0 %1381
    %v1385 = vsel %vm213, %v1379, 0
    %1387 = vmatprep.subr.mxu0 0.0
    %1388 = vmatpush1.msra.mxu0 %v1382
    %1389 = vmatprep.subr.mxu0 0.0
    %1390 = vmatpush1.msra.mxu0 0.0
    %1391 = vmatprep.subr.mxu0 0.0
    %1392 = vmatpush1.msra.mxu0 0.0
    %1393 = vmatprep.subr.mxu0 0.0
    %1394 = vmatpush1.msra.mxu0 0.0
    %1395 = vmatprep.subr.mxu0 0.0
    %1396 = vmatpush1.msra.mxu0 0.0
    %1397 = vmatprep.subr.mxu0 0.0
    %1398 = vmatpush1.msra.mxu0 0.0
    %1399 = vmatprep.subr.mxu0 0.0
    %1400 = vmatpush1.msra.mxu0 0.0
    %1401 = vmatprep.subr.mxu0 0.0
    %1402 = vmatpush1.msra.mxu0 0.0
    %1403 = vmatprep.subr.mxu0 0.0
    %1404 = vmatpush1.msra.mxu0 0.0
    %1405 = vmatprep.subr.mxu0 0.0
    %1406 = vmatpush1.msra.mxu0 0.0
    %1407 = vmatprep.subr.mxu0 0.0
    %1408 = vmatpush1.msra.mxu0 0.0
    %1409 = vmatprep.subr.mxu0 0.0
    %1410 = vmatpush1.msra.mxu0 0.0
    %1411 = vmatprep.subr.mxu0 0.0
    %1412 = vmatpush1.msra.mxu0 0.0
    %1413 = vmatprep.subr.mxu0 0.0
    %1414 = vmatpush1.msra.mxu0 0.0
    %1415 = vmatprep.subr.mxu0 0.0
    %1416 = vmatpush1.msra.mxu0 0.0
    %1417 = vmatprep.subr.mxu0 0.0
    %1418 = vmatpush1.msra.mxu0 0.0
    %1419 = vmatprep.subr.mxu0 0.0
    %1420 = vmatpush1.msra.mxu0 0.0
    %1421 = vmatprep.subr.mxu0 0.0
    %1422 = vmatpush1.msra.mxu0 0.0
    %1423 = vmatprep.subr.mxu0 0.0
    %1424 = vmatpush1.msra.mxu0 0.0
    %1425 = vmatprep.subr.mxu0 0.0
    %1426 = vmatpush1.msra.mxu0 0.0
    %1427 = vmatprep.subr.mxu0 0.0
    %1428 = vmatpush1.msra.mxu0 0.0
    %1429 = vmatprep.subr.mxu0 0.0
    %1430 = vmatpush1.msra.mxu0 0.0
    %1431 = vmatprep.subr.mxu0 0.0
    %1432 = vmatpush1.msra.mxu0 0.0
    %1433 = vmatprep.subr.mxu0 0.0
    %1434 = vmatpush1.msra.mxu0 0.0
    %1435 = vmatprep.subr.mxu0 0.0
    %1436 = vmatpush1.msra.mxu0 0.0
    %1437 = vmatprep.subr.mxu0 0.0
    %1438 = vmatpush1.msra.mxu0 0.0
    %1439 = vmatprep.subr.mxu0 0.0
    %1440 = vmatpush1.msra.mxu0 0.0
    %1441 = vmatprep.subr.mxu0 0.0
    %1442 = vmatpush1.msra.mxu0 0.0
    %1443 = vmatprep.subr.mxu0 0.0
    %1444 = vmatpush1.msra.mxu0 0.0
    %1445 = vmatprep.subr.mxu0 0.0
    %1446 = vmatpush1.msra.mxu0 0.0
    %1447 = vmatprep.subr.mxu0 0.0
    %1448 = vmatpush1.msra.mxu0 0.0
    %1449 = vmatprep.subr.mxu0 0.0
    %1450 = vmatpush1.msra.mxu0 0.0
    %1451 = vmatprep.mubr.f32.mxu0 0.0
    %1452 = vmatmul.mubr.f32.gmra.mrb[0].mxu0 %v1385
    %v1453 = vpop.f32.mrb[0].mxu0
    %v1454 = vadd.f32 0.0, %v1453
    %v1455 = vpop.f32.mrb[0].mxu0
    %1456 = vdwg.mxu0
    %1457 = vrot.lane.b32.xlu0 %v209, 40
    %v1458 = vpop.permute.xlu0 %1457
    %v1461 = vsel %vm213, %v1380, 0
    %1463 = vmatprep.subr.mxu0 0.0
    %1464 = vmatpush1.msra.mxu0 %v1458
    %1465 = vmatprep.subr.mxu0 0.0
    %1466 = vmatpush1.msra.mxu0 0.0
    %1467 = vmatprep.subr.mxu0 0.0
    %1468 = vmatpush1.msra.mxu0 0.0
    %1469 = vmatprep.subr.mxu0 0.0
    %1470 = vmatpush1.msra.mxu0 0.0
    %1471 = vmatprep.subr.mxu0 0.0
    %1472 = vmatpush1.msra.mxu0 0.0
    %1473 = vmatprep.subr.mxu0 0.0
    %1474 = vmatpush1.msra.mxu0 0.0
    %1475 = vmatprep.subr.mxu0 0.0
    %1476 = vmatpush1.msra.mxu0 0.0
    %1477 = vmatprep.subr.mxu0 0.0
    %1478 = vmatpush1.msra.mxu0 0.0
    %1479 = vmatprep.subr.mxu0 0.0
    %1480 = vmatpush1.msra.mxu0 0.0
    %1481 = vmatprep.subr.mxu0 0.0
    %1482 = vmatpush1.msra.mxu0 0.0
    %1483 = vmatprep.subr.mxu0 0.0
    %1484 = vmatpush1.msra.mxu0 0.0
    %1485 = vmatprep.subr.mxu0 0.0
    %1486 = vmatpush1.msra.mxu0 0.0
    %1487 = vmatprep.subr.mxu0 0.0
    %1488 = vmatpush1.msra.mxu0 0.0
    %1489 = vmatprep.subr.mxu0 0.0
    %1490 = vmatpush1.msra.mxu0 0.0
    %1491 = vmatprep.subr.mxu0 0.0
    %1492 = vmatpush1.msra.mxu0 0.0
    %1493 = vmatprep.subr.mxu0 0.0
    %1494 = vmatpush1.msra.mxu0 0.0
    %1495 = vmatprep.subr.mxu0 0.0
    %1496 = vmatpush1.msra.mxu0 0.0
    %1497 = vmatprep.subr.mxu0 0.0
    %1498 = vmatpush1.msra.mxu0 0.0
    %1499 = vmatprep.subr.mxu0 0.0
    %1500 = vmatpush1.msra.mxu0 0.0
    %1501 = vmatprep.subr.mxu0 0.0
    %1502 = vmatpush1.msra.mxu0 0.0
    %1503 = vmatprep.subr.mxu0 0.0
    %1504 = vmatpush1.msra.mxu0 0.0
    %1505 = vmatprep.subr.mxu0 0.0
    %1506 = vmatpush1.msra.mxu0 0.0
    %1507 = vmatprep.subr.mxu0 0.0
    %1508 = vmatpush1.msra.mxu0 0.0
    %1509 = vmatprep.subr.mxu0 0.0
    %1510 = vmatpush1.msra.mxu0 0.0
    %1511 = vmatprep.subr.mxu0 0.0
    %1512 = vmatpush1.msra.mxu0 0.0
    %1513 = vmatprep.subr.mxu0 0.0
    %1514 = vmatpush1.msra.mxu0 0.0
    %1515 = vmatprep.subr.mxu0 0.0
    %1516 = vmatpush1.msra.mxu0 0.0
    %1517 = vmatprep.subr.mxu0 0.0
    %1518 = vmatpush1.msra.mxu0 0.0
    %1519 = vmatprep.subr.mxu0 0.0
    %1520 = vmatpush1.msra.mxu0 0.0
    %1521 = vmatprep.subr.mxu0 0.0
    %1522 = vmatpush1.msra.mxu0 0.0
    %1523 = vmatprep.subr.mxu0 0.0
    %1524 = vmatpush1.msra.mxu0 0.0
    %1525 = vmatprep.subr.mxu0 0.0
    %1526 = vmatpush1.msra.mxu0 0.0
    %1527 = vmatprep.mubr.f32.mxu0 0.0
    %1528 = vmatmul.mubr.f32.gmra.mrb[0].mxu0 %v1461
    %v1529 = vpop.f32.mrb[0].mxu0
    %v1530 = vadd.f32 0.0, %v1529
    %v1531 = vpop.f32.mrb[0].mxu0
    %1532 = vdwg.mxu0
    %1535 = vrot.lane.b32.xlu0 %v794, 8
    %v1536 = vpop.permute.xlu0 %1535
    %1537 = vrot.lane.b32.xlu0 %v870, 8
    %v1538 = vpop.permute.xlu0 %1537
    %1543 = vrot.lane.b32.xlu0 %v1124, 16
    %v1544 = vpop.permute.xlu0 %1543
    %1545 = vrot.lane.b32.xlu0 %v1200, 16
    %v1546 = vpop.permute.xlu0 %1545
    %1551 = vrot.lane.b32.xlu0 %v1454, 24
    %v1552 = vpop.permute.xlu0 %1551
    %1553 = vrot.lane.b32.xlu0 %v1530, 24
    %v1554 = vpop.permute.xlu0 %1553
    %v1557 = vsel %vm213, %v463, %v1536
    %v1558 = vsel %vm213, %v540, %v1538
    %vm1559 = vcmask 130048
    %v1560 = vsel %vm1559, %v1557, %v1544
    %v1561 = vsel %vm1559, %v1558, %v1546
    %vm1562 = vcmask 195584
    %v1563 = vsel %vm1562, %v1560, %v1552
    %v1564 = vsel %vm1562, %v1561, %v1554
    %v1565 = vld [vmem:[%s4] sm:$0xff]
    %v1566 = vld [vmem:[%s4 + $0x8] sm:$0xff]
    %v1567 = vld [vmem:[%s4 + $0x10] sm:$0xff]
    %v1568 = vld [vmem:[%s4 + $0x18] sm:$0xff]
    %v1569 = vlaneseq
    %v1570 = vshrl.u32 %v1569, 7
    %v1571 = vsub.s32 7, %v1570
    %v1572 = vrot.slane %v55, %v1571
    %v1574 = vsel %vm59, %v1563, 0
    %v1577 = vsel %vm59, %v1564, 0
    %1579 = vmatprep.subr.mxu0 0.0
    %1580 = vmatpush1.msra.mxu0 %v1565
    %1581 = vmatprep.subr.mxu0 0.0
    %1582 = vmatpush1.msra.mxu0 %v1566
    %1583 = vmatprep.subr.mxu0 0.0
    %1584 = vmatpush1.msra.mxu0 %v1567
    %1585 = vmatprep.subr.mxu0 0.0
    %1586 = vmatpush1.msra.mxu0 %v1568
    %1587 = vmatprep.subr.mxu0 0.0
    %1588 = vmatpush1.msra.mxu0 0.0
    %1589 = vmatprep.subr.mxu0 0.0
    %1590 = vmatpush1.msra.mxu0 0.0
    %1591 = vmatprep.subr.mxu0 0.0
    %1592 = vmatpush1.msra.mxu0 0.0
    %1593 = vmatprep.subr.mxu0 0.0
    %1594 = vmatpush1.msra.mxu0 0.0
    %1595 = vmatprep.subr.mxu0 0.0
    %1596 = vmatpush1.msra.mxu0 0.0
    %1597 = vmatprep.subr.mxu0 0.0
    %1598 = vmatpush1.msra.mxu0 0.0
    %1599 = vmatprep.subr.mxu0 0.0
    %1600 = vmatpush1.msra.mxu0 0.0
    %1601 = vmatprep.subr.mxu0 0.0
    %1602 = vmatpush1.msra.mxu0 0.0
    %1603 = vmatprep.subr.mxu0 0.0
    %1604 = vmatpush1.msra.mxu0 0.0
    %1605 = vmatprep.subr.mxu0 0.0
    %1606 = vmatpush1.msra.mxu0 0.0
    %1607 = vmatprep.subr.mxu0 0.0
    %1608 = vmatpush1.msra.mxu0 0.0
    %1609 = vmatprep.subr.mxu0 0.0
    %1610 = vmatpush1.msra.mxu0 0.0
    %1611 = vmatprep.subr.mxu0 0.0
    %1612 = vmatpush1.msra.mxu0 0.0
    %1613 = vmatprep.subr.mxu0 0.0
    %1614 = vmatpush1.msra.mxu0 0.0
    %1615 = vmatprep.subr.mxu0 0.0
    %1616 = vmatpush1.msra.mxu0 0.0
    %1617 = vmatprep.subr.mxu0 0.0
    %1618 = vmatpush1.msra.mxu0 0.0
    %1619 = vmatprep.subr.mxu0 0.0
    %1620 = vmatpush1.msra.mxu0 0.0
    %1621 = vmatprep.subr.mxu0 0.0
    %1622 = vmatpush1.msra.mxu0 0.0
    %1623 = vmatprep.subr.mxu0 0.0
    %1624 = vmatpush1.msra.mxu0 0.0
    %1625 = vmatprep.subr.mxu0 0.0
    %1626 = vmatpush1.msra.mxu0 0.0
    %1627 = vmatprep.subr.mxu0 0.0
    %1628 = vmatpush1.msra.mxu0 0.0
    %1629 = vmatprep.subr.mxu0 0.0
    %1630 = vmatpush1.msra.mxu0 0.0
    %1631 = vmatprep.subr.mxu0 0.0
    %1632 = vmatpush1.msra.mxu0 0.0
    %1633 = vmatprep.subr.mxu0 0.0
    %1634 = vmatpush1.msra.mxu0 0.0
    %1635 = vmatprep.subr.mxu0 0.0
    %1636 = vmatpush1.msra.mxu0 0.0
    %1637 = vmatprep.subr.mxu0 0.0
    %1638 = vmatpush1.msra.mxu0 0.0
    %1639 = vmatprep.subr.mxu0 0.0
    %1640 = vmatpush1.msra.mxu0 0.0
    %1641 = vmatprep.subr.mxu0 0.0
    %1642 = vmatpush1.msra.mxu0 0.0
    %1643 = vmatprep.mubr.f32.mxu0 0.0
    %1644 = vmatmul.mubr.f32.gmra.mrb[0].mxu0 %v1574
    %v1645 = vpop.f32.mrb[0].mxu0
    %v1646 = vadd.f32 %v1572, %v1645
    %v1647 = vpop.f32.mrb[0].mxu0
    %1648 = vmatprep.mubr.f32.mxu0 0.0
    %1649 = vmatmul.mubr.f32.gmra.mrb[0].mxu0 %v1577
    %v1650 = vpop.f32.mrb[0].mxu0
    %v1651 = vadd.f32 %v1572, %v1650
    %v1652 = vpop.f32.mrb[0].mxu0
    %1653 = vdwg.mxu0
    %v1654 = vadd.f32 %v57, %v1646
    %v1655 = vadd.f32 %v58, %v1651
    %v1656 = vsel %vm59, %v1654, 0.0
    %1657 = vadd.xlane.f32.xlu0 %v1656
    %v1658 = vpop.xlane.xlu0 %1657
    %v1659 = vsel %vm59, %v1655, 0.0
    %1660 = vadd.xlane.f32.xlu0 %v1659
    %v1661 = vpop.xlane.xlu0 %1660
    %v1662 = vmul.f32 %v1658, %v66
    %v1663 = vmul.f32 %v1661, %v66
    %v1664 = vsub.f32 %v1654, %v1662
    %v1665 = vsub.f32 %v1655, %v1663
    %v1666 = vmul.f32 %v1664, %v1664
    %v1667 = vmul.f32 %v1665, %v1665
    %v1668 = vsel %vm59, %v1666, 0.0
    %1669 = vadd.xlane.f32.xlu0 %v1668
    %v1670 = vpop.xlane.xlu0 %1669
    %v1671 = vsel %vm59, %v1667, 0.0
    %1672 = vadd.xlane.f32.xlu0 %v1671
    %v1673 = vpop.xlane.xlu0 %1672
    %v1674 = vmul.f32 %v1670, %v66
    %v1675 = vmul.f32 %v1673, %v66
    %v1676 = vadd.f32 %v1674, 1e-05
    %v1677 = vadd.f32 %v1675, 1e-05
    %v1678 = vrsqrt.pop %v1676
    %v1679 = vrsqrt.pop %v1677
    %v1680 = vmul.f32 %v1664, %v1678
    %v1681 = vmul.f32 %v1665, %v1679
    %v1682 = vlaneseq
    %v1683 = vshrl.u32 %v1682, 7
    %v1684 = vsub.s32 2, %v1683
    %v1685 = vrot.slane %v55, %v1684
    %v1686 = vmul.f32 %v1680, %v1685
    %v1687 = vmul.f32 %v1681, %v1685
    %v1688 = vlaneseq
    %v1689 = vshrl.u32 %v1688, 7
    %v1690 = vsub.s32 3, %v1689
    %v1691 = vrot.slane %v55, %v1690
    %v1692 = vadd.f32 %v1686, %v1691
    %v1693 = vadd.f32 %v1687, %v1691
    %v1694 = vld [vmem:[%s5] sm:$0xff]
    %v1695 = vld [vmem:[%s5 + $0x8] sm:$0xff]
    %v1696 = vld [vmem:[%s5 + $0x10] sm:$0xff]
    %v1697 = vld [vmem:[%s5 + $0x18] sm:$0xff]
    %v1698 = vld [vmem:[%s2] sm:$0x1]
    %v1700 = vlaneseq
    %v1701 = vshrl.u32 %v1700, 7
    %v1702 = vsub.s32 0, %v1701
    %v1703 = vrot.slane %v1698, %v1702
    %v1706 = vsel %vm59, %v1692, 0
    %v1709 = vsel %vm59, %v1693, 0
    %1711 = vmatprep.subr.mxu0 0.0
    %1712 = vmatpush1.msra.mxu0 %v1694
    %1713 = vmatprep.subr.mxu0 0.0
    %1714 = vmatpush1.msra.mxu0 %v1695
    %1715 = vmatprep.subr.mxu0 0.0
    %1716 = vmatpush1.msra.mxu0 %v1696
    %1717 = vmatprep.subr.mxu0 0.0
    %1718 = vmatpush1.msra.mxu0 %v1697
    %1719 = vmatprep.subr.mxu0 0.0
    %1720 = vmatpush1.msra.mxu0 0.0
    %1721 = vmatprep.subr.mxu0 0.0
    %1722 = vmatpush1.msra.mxu0 0.0
    %1723 = vmatprep.subr.mxu0 0.0
    %1724 = vmatpush1.msra.mxu0 0.0
    %1725 = vmatprep.subr.mxu0 0.0
    %1726 = vmatpush1.msra.mxu0 0.0
    %1727 = vmatprep.subr.mxu0 0.0
    %1728 = vmatpush1.msra.mxu0 0.0
    %1729 = vmatprep.subr.mxu0 0.0
    %1730 = vmatpush1.msra.mxu0 0.0
    %1731 = vmatprep.subr.mxu0 0.0
    %1732 = vmatpush1.msra.mxu0 0.0
    %1733 = vmatprep.subr.mxu0 0.0
    %1734 = vmatpush1.msra.mxu0 0.0
    %1735 = vmatprep.subr.mxu0 0.0
    %1736 = vmatpush1.msra.mxu0 0.0
    %1737 = vmatprep.subr.mxu0 0.0
    %1738 = vmatpush1.msra.mxu0 0.0
    %1739 = vmatprep.subr.mxu0 0.0
    %1740 = vmatpush1.msra.mxu0 0.0
    %1741 = vmatprep.subr.mxu0 0.0
    %1742 = vmatpush1.msra.mxu0 0.0
    %1743 = vmatprep.subr.mxu0 0.0
    %1744 = vmatpush1.msra.mxu0 0.0
    %1745 = vmatprep.subr.mxu0 0.0
    %1746 = vmatpush1.msra.mxu0 0.0
    %1747 = vmatprep.subr.mxu0 0.0
    %1748 = vmatpush1.msra.mxu0 0.0
    %1749 = vmatprep.subr.mxu0 0.0
    %1750 = vmatpush1.msra.mxu0 0.0
    %1751 = vmatprep.subr.mxu0 0.0
    %1752 = vmatpush1.msra.mxu0 0.0
    %1753 = vmatprep.subr.mxu0 0.0
    %1754 = vmatpush1.msra.mxu0 0.0
    %1755 = vmatprep.subr.mxu0 0.0
    %1756 = vmatpush1.msra.mxu0 0.0
    %1757 = vmatprep.subr.mxu0 0.0
    %1758 = vmatpush1.msra.mxu0 0.0
    %1759 = vmatprep.subr.mxu0 0.0
    %1760 = vmatpush1.msra.mxu0 0.0
    %1761 = vmatprep.subr.mxu0 0.0
    %1762 = vmatpush1.msra.mxu0 0.0
    %1763 = vmatprep.subr.mxu0 0.0
    %1764 = vmatpush1.msra.mxu0 0.0
    %1765 = vmatprep.subr.mxu0 0.0
    %1766 = vmatpush1.msra.mxu0 0.0
    %1767 = vmatprep.subr.mxu0 0.0
    %1768 = vmatpush1.msra.mxu0 0.0
    %1769 = vmatprep.subr.mxu0 0.0
    %1770 = vmatpush1.msra.mxu0 0.0
    %1771 = vmatprep.subr.mxu0 0.0
    %1772 = vmatpush1.msra.mxu0 0.0
    %1773 = vmatprep.subr.mxu0 0.0
    %1774 = vmatpush1.msra.mxu0 0.0
    %1775 = vmatprep.mubr.f32.mxu0 0.0
    %1776 = vmatmul.mubr.f32.gmra.mrb[0].mxu0 %v1706
    %v1777 = vpop.f32.mrb[0].mxu0
    %v1778 = vadd.f32 %v1703, %v1777
    %v1779 = vpop.f32.mrb[0].mxu0
    %1780 = vmatprep.mubr.f32.mxu0 0.0
    %1781 = vmatmul.mubr.f32.gmra.mrb[0].mxu0 %v1709
    %v1782 = vpop.f32.mrb[0].mxu0
    %v1783 = vadd.f32 %v1703, %v1782
    %v1784 = vpop.f32.mrb[0].mxu0
    %1785 = vdwg.mxu0
    %v1786 = vmul.f32 %v1778, 0.5
    %v1787 = vmul.f32 %v1783, 0.5
    %v1788 = vmul.f32 %v1778, 0.044715
    %v1789 = vmul.f32 %v1783, 0.044715
    %v1790 = vmul.f32 %v1788, %v1778
    %v1791 = vmul.f32 %v1789, %v1783
    %v1792 = vmul.f32 %v1790, %v1778
    %v1793 = vmul.f32 %v1791, %v1783
    %v1794 = vadd.f32 %v1778, %v1792
    %v1795 = vadd.f32 %v1783, %v1793
    %v1796 = vmul.f32 %v1794, 0.7978846
    %v1797 = vmul.f32 %v1795, 0.7978846
    %v1798 = vtanh.pop %v1796
    %v1799 = vtanh.pop %v1797
    %v1800 = vadd.f32 %v1798, 1.0
    %v1801 = vadd.f32 %v1799, 1.0
    %v1802 = vmul.f32 %v1786, %v1800
    %v1803 = vmul.f32 %v1787, %v1801
    %v1804 = vld [vmem:[%s6] sm:$0xff]
    %v1805 = vld [vmem:[%s6 + $0x8] sm:$0xff]
    %v1806 = vld [vmem:[%s6 + $0x10] sm:$0xff]
    %v1807 = vld [vmem:[%s6 + $0x18] sm:$0xff]
    %v1808 = vld [vmem:[%s6 + $0x20] sm:$0xff]
    %v1809 = vld [vmem:[%s6 + $0x28] sm:$0xff]
    %v1810 = vld [vmem:[%s6 + $0x30] sm:$0xff]
    %v1811 = vld [vmem:[%s6 + $0x38] sm:$0xff]
    %v1812 = vlaneseq
    %v1813 = vshrl.u32 %v1812, 7
    %v1814 = vsub.s32 0, %v1813
    %v1815 = vrot.slane %v56, %v1814
    %vm1816 = vcmask 523264
    %v1818 = vsel %vm1816, %v1802, 0
    %v1821 = vsel %vm1816, %v1803, 0
    %1823 = vmatprep.subr.mxu0 0.0
    %1824 = vmatpush1.msra.mxu0 %v1804
    %1825 = vmatprep.subr.mxu0 0.0
    %1826 = vmatpush1.msra.mxu0 %v1805
    %1827 = vmatprep.subr.mxu0 0.0
    %1828 = vmatpush1.msra.mxu0 %v1806
    %1829 = vmatprep.subr.mxu0 0.0
    %1830 = vmatpush1.msra.mxu0 %v1807
    %1831 = vmatprep.subr.mxu0 0.0
    %1832 = vmatpush1.msra.mxu0 %v1808
    %1833 = vmatprep.subr.mxu0 0.0
    %1834 = vmatpush1.msra.mxu0 %v1809
    %1835 = vmatprep.subr.mxu0 0.0
    %1836 = vmatpush1.msra.mxu0 %v1810
    %1837 = vmatprep.subr.mxu0 0.0
    %1838 = vmatpush1.msra.mxu0 %v1811
    %1839 = vmatprep.subr.mxu0 0.0
    %1840 = vmatpush1.msra.mxu0 0.0
    %1841 = vmatprep.subr.mxu0 0.0
    %1842 = vmatpush1.msra.mxu0 0.0
    %1843 = vmatprep.subr.mxu0 0.0
    %1844 = vmatpush1.msra.mxu0 0.0
    %1845 = vmatprep.subr.mxu0 0.0
    %1846 = vmatpush1.msra.mxu0 0.0
    %1847 = vmatprep.subr.mxu0 0.0
    %1848 = vmatpush1.msra.mxu0 0.0
    %1849 = vmatprep.subr.mxu0 0.0
    %1850 = vmatpush1.msra.mxu0 0.0
    %1851 = vmatprep.subr.mxu0 0.0
    %1852 = vmatpush1.msra.mxu0 0.0
    %1853 = vmatprep.subr.mxu0 0.0
    %1854 = vmatpush1.msra.mxu0 0.0
    %1855 = vmatprep.subr.mxu0 0.0
    %1856 = vmatpush1.msra.mxu0 0.0
    %1857 = vmatprep.subr.mxu0 0.0
    %1858 = vmatpush1.msra.mxu0 0.0
    %1859 = vmatprep.subr.mxu0 0.0
    %1860 = vmatpush1.msra.mxu0 0.0
    %1861 = vmatprep.subr.mxu0 0.0
    %1862 = vmatpush1.msra.mxu0 0.0
    %1863 = vmatprep.subr.mxu0 0.0
    %1864 = vmatpush1.msra.mxu0 0.0
    %1865 = vmatprep.subr.mxu0 0.0
    %1866 = vmatpush1.msra.mxu0 0.0
    %1867 = vmatprep.subr.mxu0 0.0
    %1868 = vmatpush1.msra.mxu0 0.0
    %1869 = vmatprep.subr.mxu0 0.0
    %1870 = vmatpush1.msra.mxu0 0.0
    %1871 = vmatprep.subr.mxu0 0.0
    %1872 = vmatpush1.msra.mxu0 0.0
    %1873 = vmatprep.subr.mxu0 0.0
    %1874 = vmatpush1.msra.mxu0 0.0
    %1875 = vmatprep.subr.mxu0 0.0
    %1876 = vmatpush1.msra.mxu0 0.0
    %1877 = vmatprep.subr.mxu0 0.0
    %1878 = vmatpush1.msra.mxu0 0.0
    %1879 = vmatprep.subr.mxu0 0.0
    %1880 = vmatpush1.msra.mxu0 0.0
    %1881 = vmatprep.subr.mxu0 0.0
    %1882 = vmatpush1.msra.mxu0 0.0
    %1883 = vmatprep.subr.mxu0 0.0
    %1884 = vmatpush1.msra.mxu0 0.0
    %1885 = vmatprep.subr.mxu0 0.0
    %1886 = vmatpush1.msra.mxu0 0.0
    %1887 = vmatprep.mubr.f32.mxu0 0.0
    %1888 = vmatmul.mubr.f32.gmra.mrb[0].mxu0 %v1818
    %v1889 = vpop.f32.mrb[0].mxu0
    %v1890 = vadd.f32 %v1815, %v1889
    %v1891 = vpop.f32.mrb[0].mxu0
    %1892 = vmatprep.mubr.f32.mxu0 0.0
    %1893 = vmatmul.mubr.f32.gmra.mrb[0].mxu0 %v1821
    %v1894 = vpop.f32.mrb[0].mxu0
    %v1895 = vadd.f32 %v1815, %v1894
    %v1896 = vpop.f32.mrb[0].mxu0
    %1897 = vdwg.mxu0
    %v1898 = vadd.f32 %v1654, %v1890
    %v1899 = vadd.f32 %v1655, %v1895
    %1900 = vst.msk [vmem:[#allocation7] sm:$0xff] %vm59, %v1898
    %1901 = vst.msk [vmem:[#allocation7 + $0x8] sm:$0xff] %vm59, %v1899
    // Predicated region
    $region38: #{tpu_custom_call.1} parent=1 // pred_check
      _
    $region39: #{tpu_custom_call.1} parent=1 // pred_check_branch
      %1903 = sbr.rel (0) target = $region41
    $region40: #{tpu_custom_call.1} parent=1 // pred_region
      %s1905 = ssub.s32 256, 256
      %1906 = vsyncadd [#allocation4], %s1905
      %s1907 = sshll.u32 [#allocation7], 4
      %s1908 = int_to_ptr.vmem [resolvable:$true] %s1907
      %1913 = dma.vmem_to_hbm [thread:$0]  %s1908, 256, %s7, [#allocation4], 128, 128, 8
    $region41: #{tpu_custom_call.1} parent=1 // pred_fallthru
      _
    // Predicated region
    $region42: #{tpu_custom_call.1} parent=1 // pred_check
      _
    $region43: #{tpu_custom_call.1} parent=1 // pred_check_branch
      %1915 = sbr.rel (0) target = $region45
    $region44: #{tpu_custom_call.1} parent=1 // pred_region
      %1916 = dma.done [#allocation4], 256
    $region45: #{tpu_custom_call.1} parent=1 // pred_fallthru
      _
    %1917 = vsyncpa [#allocation3], 1
    %1918 = vsyncpa [#allocation6], 1
    %1919 = vsyncpa [#allocation4], 1

</llo_original>
